<compile_context>
chip_gen: v7x
topology: tpu7x:2x2x1
jax: 0.10.0
libtpu: 0.0.40
codegen_flags: <defaults>
</compile_context>

<pallas_src>
import functools

import jax
import jax.numpy as jnp
from jax import lax
from jax.experimental import pallas as pl
from jax.experimental.pallas import tpu as pltpu


# ----------------------------------------------------------------------------
# helpers
# ----------------------------------------------------------------------------
def _pick_tm(m):
    """Largest clean M-tile (fewer, fatter grid steps; per-step blocks stay small)."""
    for tm in (2048, 1024, 512, 256, 128, 64, 32, 16, 8):
        if m % tm == 0:
            return tm
    return m


def _ceil_to(x, mult):
    return mult * (-(-x // mult))


# ----------------------------------------------------------------------------
# Kernel 1: fused 1x1 projections (kc | kd | vs), bf16 MXU operands, f32 acc
# ----------------------------------------------------------------------------
def _proj_kernel(v_ref, w_ref, b_ref, o_ref):
    acc = jnp.dot(v_ref[...], w_ref[...], preferred_element_type=jnp.float32)
    o_ref[...] = (acc + b_ref[...]).astype(o_ref.dtype)


def fused_projection(v_tok_bf16, wv, bv, tm):
    M, C = v_tok_bf16.shape
    PN = wv.shape[1]
    return pl.pallas_call(
        _proj_kernel,
        out_shape=jax.ShapeDtypeStruct((M, PN), jnp.bfloat16),
        grid=(M // tm,),
        in_specs=[
            pl.BlockSpec((tm, C), lambda i: (i, 0)),
            pl.BlockSpec((C, PN), lambda i: (0, 0)),
            pl.BlockSpec((1, PN), lambda i: (0, 0)),
        ],
        out_specs=pl.BlockSpec((tm, PN), lambda i: (i, 0)),
        compiler_params=pltpu.CompilerParams(dimension_semantics=("parallel",)),
    )(v_tok_bf16, wv, bv)


# ----------------------------------------------------------------------------
# Kernel 2: collect-diffuse attention (per batch) fused with the epilogue
#           (w_o + folded w_m taps + BN + residual + LeakyReLU)
# ----------------------------------------------------------------------------
def _attn_epilogue_kernel(q_ref, proj_ref, res_ref, wc_ref, bc_ref,
                          scale_ref, shift_ref, o_ref, *, n_head, d_o):
    dh = d_o // n_head
    proj = proj_ref[...].astype(jnp.float32)     # (hw, PN1): [kc | kd | vs] tokens
    qv = q_ref[0]                                # (1, d_o), already scaled by 1/T
    res = res_ref[...]                           # (hw, d_o) residual (un-padded)

    # collect-diffuse attention per head, entirely on VPU/XLU/EUP.
    o_parts = []
    for h in range(n_head):
        qh = qv[:, h * dh:(h + 1) * dh]                              # (1, dh)
        kc = proj[:, h * dh:(h + 1) * dh]                            # (hw, dh)
        kd = proj[:, d_o + h * dh:d_o + (h + 1) * dh]                # (hw, dh)
        vv = proj[:, 2 * d_o + h * dh:2 * d_o + (h + 1) * dh]        # (hw, dh)

        # collect branch: logits over spatial positions (lane reduce), softmax
        # over the sublane axis, pooled value.
        s = jnp.sum(kc * qh, axis=-1, keepdims=True)                 # (hw, 1)
        m = jnp.max(s, axis=0, keepdims=True)
        e = jnp.exp(s - m)
        denom = jnp.sum(e, axis=0, keepdims=True)
        # approx reciprocal (~1e-3 rel err) -- deliberate, within tolerance.
        p = e * pl.reciprocal(denom, approx=True)
        attn = jnp.sum(p * vv, axis=0, keepdims=True)                # (1, dh)

        # diffuse branch: sigmoid gate and broadcast outer product.
        dif = jax.nn.sigmoid(jnp.sum(kd * qh, axis=-1, keepdims=True))  # (hw, 1)
        o_parts.append(dif * attn)                                   # (hw, dh)

    o_att = jnp.concatenate(o_parts, axis=-1)                        # (hw, d_o)

    # epilogue MXU pass (bf16 operands, f32 acc):
    # columns [0:d_o]=w_o(x)  [d_o:2d_o]=w_o(x) (raw attn)  [2d_o:2d_o+9]=w_m taps.
    y = jnp.dot(o_att.astype(jnp.bfloat16), wc_ref[...],
                preferred_element_type=jnp.float32) + bc_ref[...]    # (hw, PN2)

    # eval-BN + residual + LeakyReLU(0.1) in f32 on the first d_o lanes only.
    z = y[:, :d_o] * scale_ref[...] + shift_ref[...] + res
    act = jnp.where(z >= 0.0, z, 0.1 * z)
    o_ref[...] = jnp.concatenate([act, y[:, d_o:]], axis=-1)         # lane-dense store


def attn_epilogue(q3, proj, v_std, wc, bc, scale, shift, B, hw, d_o, n_head):
    M, PN1 = proj.shape
    PN2 = wc.shape[1]
    kernel = functools.partial(_attn_epilogue_kernel, n_head=n_head, d_o=d_o)
    return pl.pallas_call(
        kernel,
        out_shape=jax.ShapeDtypeStruct((M, PN2), jnp.float32),
        grid=(B,),
        in_specs=[
            pl.BlockSpec((1, 1, d_o), lambda b: (b, 0, 0)),   # pre-scaled q row of batch b
            pl.BlockSpec((hw, PN1), lambda b: (b, 0)),        # kc|kd|vs tokens of batch b
            pl.BlockSpec((hw, d_o), lambda b: (b, 0)),        # residual tokens of batch b
            pl.BlockSpec((d_o, PN2), lambda b: (0, 0)),       # [w_o | w_o | w_o@w_m-taps]
            pl.BlockSpec((1, PN2), lambda b: (0, 0)),
            pl.BlockSpec((1, d_o), lambda b: (0, 0)),         # BN scale
            pl.BlockSpec((1, d_o), lambda b: (0, 0)),         # BN shift
        ],
        out_specs=pl.BlockSpec((hw, PN2), lambda b: (b, 0)),
        compiler_params=pltpu.CompilerParams(dimension_semantics=("parallel",)),
    )(q3, proj, v_std, wc, bc, scale, shift)


# ----------------------------------------------------------------------------
# one-time weight packing (done OUTSIDE the jitted forward)
# ----------------------------------------------------------------------------
def prepare_params(params, d_q, d_v, n_head, lane=128, eps=1e-5):
    d_o = d_v
    C = d_v
    temperature = float(d_o // n_head) ** 0.5    # np.power(d_o // n_head, 0.5)

    def conv1x1_mat(w):  # (d_o, C, 1, 1) -> (C_in, C_out)
        return jnp.transpose(w.reshape(d_o, C))

    # fused kc|kd|vs projection weight, N padded to a lane multiple, bf16 operands.
    wv = jnp.concatenate(
        [conv1x1_mat(params["w_kc_w"]),
         conv1x1_mat(params["w_kd_w"]),
         conv1x1_mat(params["w_vs_w"])], axis=1)                     # (C, 3*d_o)
    bv = jnp.concatenate([params["w_kc_b"], params["w_kd_b"], params["w_vs_b"]])
    pn = _ceil_to(wv.shape[1], lane)
    wv = jnp.pad(wv, ((0, 0), (0, pn - wv.shape[1]))).astype(jnp.bfloat16)
    bv = jnp.pad(bv, (0, pn - bv.shape[0])).reshape(1, -1)

    # w_qs linear (plain XLA dot in the wrapper); fold 1/temperature into the
    # weight/bias so neither the collect logits nor the diffuse gate rescale q.
    wq = jnp.transpose(params["w_qs_w"]) / temperature               # (d_q, d_o)
    bq = (params["w_qs_b"] / temperature).reshape(1, -1)

    # combined epilogue weight: [w_o | w_o | w_o @ w_m-taps], padded to a lane multiple.
    # Folding w_m through w_o is exact:  (x@Wo + bo)@Wt  ==  x@(Wo@Wt) + bo@Wt.
    wo = jnp.transpose(params["w_o_w"].reshape(d_o, d_o))            # (C_in, C_out)
    wtaps = params["w_m_w"][0].reshape(d_o, 9)                       # (C_out, 9), k = ky*3+kx
    wtaps_eff = wo @ wtaps                                           # (C_in, 9)
    btaps_eff = params["w_o_b"] @ wtaps                              # (9,)
    wc = jnp.concatenate([wo, wo, wtaps_eff], axis=1)                # (C_in, 2*d_o+9)
    cn = _ceil_to(wc.shape[1], lane)
    wc = jnp.pad(wc, ((0, 0), (0, cn - wc.shape[1]))).astype(jnp.bfloat16)
    bc = jnp.concatenate([params["w_o_b"], params["w_o_b"], btaps_eff])
    bc = jnp.pad(bc, (0, cn - bc.shape[0])).reshape(1, -1)

    # eval BatchNorm folded to scale/shift (only d_o lanes needed in-kernel).
    scale = params["bn_gamma"] / jnp.sqrt(params["bn_var"] + eps)
    shift = params["bn_beta"] - params["bn_mean"] * scale

    return {
        "wv": wv, "bv": bv, "wq": wq, "bq": bq,
        "wc": wc, "bc": bc,
        "scale": scale.reshape(1, -1), "shift": shift.reshape(1, -1),
        "w_m_b": params["w_m_b"],
    }


# ----------------------------------------------------------------------------
# GaranAttention forward (glue in plain JAX, hot paths in 2 Pallas kernels)
# ----------------------------------------------------------------------------
def garan_attention_forward(q, v, prep, n_head=2):
    B, C, H, W = v.shape                       # v is NCHW, like the PyTorch module
    d_o = C
    hw = H * W
    M = B * hw
    assert hw % 8 == 0, "spatial token count per batch must be a sublane multiple"

    # Token layouts.  The reference's view / permute(0,1,4,3,2) / view quirk swaps
    # the spatial linearization between the attention and the epilogue, so feeding
    # the projection with (W,H)-linearized tokens makes the attention output land
    # directly in the epilogue/output token order (no (M,d_o) transpose round trip).
    v_std = jnp.transpose(v, (0, 2, 3, 1)).reshape(M, C)     # residual / output order
    v_perm = jnp.transpose(v, (0, 3, 2, 1)).reshape(M, C)    # projection order

    # tiny w_qs linear stays in plain XLA; 1/temperature is already folded in.
    q_s = (q @ prep["wq"] + prep["bq"]).reshape(B, 1, d_o)

    # --- kernel 1: kc|kd|vs projections (bf16 MXU operands, lane-dense bf16 out) --
    tm = _pick_tm(M)
    proj = fused_projection(v_perm.astype(jnp.bfloat16), prep["wv"], prep["bv"], tm)

    # --- kernel 2: per-batch collect-diffuse attention + fused epilogue ----------
    comb = attn_epilogue(q_s, proj, v_std, prep["wc"], prep["bc"],
                         prep["scale"], prep["shift"], B, hw, d_o, n_head)

    out_tok = comb[:, :d_o]                    # activated output tokens
    attn_tok = comb[:, d_o:2 * d_o]            # raw w_o output (attn)
    taps_tok = comb[:, 2 * d_o:2 * d_o + 9]    # 3x3-conv channel-reduced taps

    output = jnp.transpose(out_tok.reshape(B, H, W, d_o), (0, 3, 1, 2))
    attn_nchw = jnp.transpose(attn_tok.reshape(B, H, W, d_o), (0, 3, 1, 2))

    # 3x3 conv spatial accumulation: 9 shifted adds of (B,H,W) maps (tiny glue).
    taps = taps_tok.reshape(B, H, W, 9)
    taps_pad = jnp.pad(taps, ((0, 0), (1, 1), (1, 1), (0, 0)))
    m = jnp.zeros((B, H, W), jnp.float32)
    for ky in range(3):
        for kx in range(3):
            m = m + taps_pad[:, ky:ky + H, kx:kx + W, ky * 3 + kx]
    m_attn = (m + prep["w_m_b"][0]).reshape(B, hw)

    return output, m_attn, attn_nchw


# ----------------------------------------------------------------------------
# deterministic parameter initialization (shapes per the module __init__)
# ----------------------------------------------------------------------------
def init_params(key, d_q, d_v):
    d_o = d_v
    ks = jax.random.split(key, 12)
    s = 0.1
    return {
        "w_qs_w": s * jax.random.normal(ks[0], (d_o, d_q), jnp.float32),
        "w_qs_b": s * jax.random.normal(ks[1], (d_o,), jnp.float32),
        "w_kc_w": s * jax.random.normal(ks[2], (d_o, d_v, 1, 1), jnp.float32),
        "w_kc_b": s * jax.random.normal(ks[3], (d_o,), jnp.float32),
        "w_kd_w": s * jax.random.normal(ks[4], (d_o, d_v, 1, 1), jnp.float32),
        "w_kd_b": s * jax.random.normal(ks[5], (d_o,), jnp.float32),
        "w_vs_w": s * jax.random.normal(ks[6], (d_o, d_v, 1, 1), jnp.float32),
        "w_vs_b": s * jax.random.normal(ks[7], (d_o,), jnp.float32),
        "w_m_w": s * jax.random.normal(ks[8], (1, d_o, 3, 3), jnp.float32),
        "w_m_b": s * jax.random.normal(ks[9], (1,), jnp.float32),
        "w_o_w": s * jax.random.normal(ks[10], (d_o, d_o, 1, 1), jnp.float32),
        "w_o_b": s * jax.random.normal(ks[11], (d_o,), jnp.float32),
        "bn_gamma": jnp.ones((d_o,), jnp.float32),
        "bn_beta": jnp.zeros((d_o,), jnp.float32),
        "bn_mean": jnp.zeros((d_o,), jnp.float32),
        "bn_var": jnp.ones((d_o,), jnp.float32),
    }


# ----------------------------------------------------------------------------
# pure-JAX reference (mirrors the PyTorch forward) for a correctness check
# ----------------------------------------------------------------------------
def _reference_forward(q, v, params, n_head):
    B, C, H, W = v.shape
    d_o = C
    dh = d_o // n_head
    hw = H * W
    temperature = float(dh) ** 0.5

    qp = q @ params["w_qs_w"].T + params["w_qs_b"]

    def conv1x1(x, w, b):
        return jnp.einsum("bchw,oc->bohw", x, w.reshape(d_o, C)) + b[None, :, None, None]

    def heads(x):
        return (x.reshape(B, n_head, dh, hw).transpose(0, 1, 3, 2)
                .reshape(B * n_head, hw, dh))

    kc = heads(conv1x1(v, params["w_kc_w"], params["w_kc_b"]))
    kd = heads(conv1x1(v, params["w_kd_w"], params["w_kd_b"]))
    vv = heads(conv1x1(v, params["w_vs_w"], params["w_vs_b"]))
    qh = qp.reshape(B * n_head, 1, dh)

    logit = jnp.einsum("bqd,bkd->bqk", qh, kc) / temperature
    p = jax.nn.softmax(logit, axis=2)
    attn = jnp.einsum("bqk,bkd->bqd", p, vv)
    dif = jax.nn.sigmoid(jnp.einsum("bkd,bqd->bkq", kd, qh) / temperature)
    out = dif * attn

    out = (out.reshape(B, n_head, H, W, dh).transpose(0, 1, 4, 3, 2)
           .reshape(B, d_o, H, W))
    attn_o = (jnp.einsum("bchw,oc->bohw", out, params["w_o_w"].reshape(d_o, d_o))
              + params["w_o_b"][None, :, None, None])

    ap = jnp.pad(attn_o, ((0, 0), (0, 0), (1, 1), (1, 1)))
    m = jnp.zeros((B, H, W), jnp.float32)
    for ky in range(3):
        for kx in range(3):
            m = m + jnp.einsum("bchw,c->bhw", ap[:, :, ky:ky + H, kx:kx + W],
                               params["w_m_w"][0, :, ky, kx])
    m_attn = (m + params["w_m_b"][0]).reshape(B, hw)

    eps = 1e-5
    scale = params["bn_gamma"] / jnp.sqrt(params["bn_var"] + eps)
    shift = params["bn_beta"] - params["bn_mean"] * scale
    y = attn_o * scale[None, :, None, None] + shift[None, :, None, None] + v
    output = jnp.where(y >= 0.0, y, 0.1 * y)
    return output, m_attn, attn_o


if __name__ == "__main__":
    key = jax.random.PRNGKey(0)
    B, d_q, d_v, H, W, n_head = 2, 32, 32, 8, 8, 2

    k_p, k_q, k_v = jax.random.split(key, 3)
    params = init_params(k_p, d_q, d_v)
    prep = prepare_params(params, d_q, d_v, n_head)    # one-time weight packing, outside jit
    q = jax.random.normal(k_q, (B, d_q), jnp.float32)
    v = jax.random.normal(k_v, (B, d_v, H, W), jnp.float32)

    fwd = jax.jit(functools.partial(garan_attention_forward, n_head=n_head))
    output, m_attn, attn = fwd(q, v, prep)
    jax.block_until_ready((output, m_attn, attn))

    assert output.shape == (B, d_v, H, W)
    assert m_attn.shape == (B, H * W)
    assert attn.shape == (B, d_v, H, W)
    assert jnp.all(jnp.isfinite(output)) and jnp.all(jnp.isfinite(m_attn))

    # correctness check against a pure-JAX f32 reference of the PyTorch forward
    # (bf16 MXU operands + f32 accumulation stay well within this tolerance)
    ref_out, ref_m, ref_attn = _reference_forward(q, v, params, n_head)
    assert jnp.allclose(output, ref_out, rtol=2e-2, atol=2e-2)
    assert jnp.allclose(m_attn, ref_m, rtol=2e-2, atol=2e-2)
    assert jnp.allclose(attn, ref_attn, rtol=2e-2, atol=2e-2)

    print("KERNEL_OK")
</pallas_src>

<mosaic_0001>
module attributes {stable_mosaic.version = 11 : i64} {
  func.func @_proj_kernel(%arg0: i32, %arg1: memref<128x32xbf16, #tpu.memory_space<vmem>>, %arg2: memref<32x128xbf16, #tpu.memory_space<vmem>>, %arg3: memref<1x128xf32, #tpu.memory_space<vmem>>, %arg4: memref<128x128xbf16, #tpu.memory_space<vmem>>) attributes {dimension_semantics = [#tpu.dimension_semantics<parallel>], iteration_bounds = array<i64: 1>, scalar_prefetch = 0 : i64, scratch_operands = 0 : i64, tpu.core_type = #tpu.core_type<tc>, window_params = [{transform_indices = @transform_0, window_bounds = array<i64: 128, 32>}, {pipeline_mode = #tpu.pipeline_mode<synchronous>, transform_indices = @transform_1, window_bounds = array<i64: 32, 128>}, {pipeline_mode = #tpu.pipeline_mode<synchronous>, transform_indices = @transform_2, window_bounds = array<i64: 1, 128>}, {transform_indices = @transform_3, window_bounds = array<i64: 128, 128>}]} {
    %c0 = arith.constant 0 : index
    %c0_0 = arith.constant 0 : index
    %0 = vector.load %arg1[%c0, %c0_0] : memref<128x32xbf16, #tpu.memory_space<vmem>>, vector<128x32xbf16>
    %c0_1 = arith.constant 0 : index
    %c0_2 = arith.constant 0 : index
    %1 = vector.load %arg2[%c0_1, %c0_2] : memref<32x128xbf16, #tpu.memory_space<vmem>>, vector<32x128xbf16>
    %cst = arith.constant dense<0.000000e+00> : vector<128x128xf32>
    %2 = tpu.matmul %0, %1, %cst {dimension_numbers = #tpu.dot_dimension_numbers<[1], [0], [0], [1], [0, 0, 1, 1], [], []>} : vector<128x32xbf16>, vector<32x128xbf16>, vector<128x128xf32> -> vector<128x128xf32>
    %c0_3 = arith.constant 0 : index
    %c0_4 = arith.constant 0 : index
    %3 = vector.load %arg3[%c0_3, %c0_4] : memref<1x128xf32, #tpu.memory_space<vmem>>, vector<1x128xf32>
    %4 = vector.broadcast %3 : vector<1x128xf32> to vector<128x128xf32>
    %5 = arith.addf %2, %4 : vector<128x128xf32>
    %6 = arith.truncf %5 : vector<128x128xf32> to vector<128x128xbf16>
    %c0_5 = arith.constant 0 : index
    %c0_6 = arith.constant 0 : index
    %7 = vector.load %arg4[%c0_5, %c0_6] : memref<128x128xbf16, #tpu.memory_space<vmem>>, vector<128x128xbf16>
    tpu.vector_store %arg4[%c0_5, %c0_6], %6 {strides = array<i32>} : memref<128x128xbf16, #tpu.memory_space<vmem>>, vector<128x128xbf16>,
    return
  }
  func.func @transform_0(%arg0: i32) -> (i32, i32) {
    %c0_i32 = arith.constant 0 : i32
    %c0_i32_0 = arith.constant 0 : i32
    return %arg0, %c0_i32 : i32, i32
  }
  func.func @transform_1(%arg0: i32) -> (i32, i32) {
    %c0_i32 = arith.constant 0 : i32
    %c0_i32_0 = arith.constant 0 : i32
    %c0_i32_1 = arith.constant 0 : i32
    return %c0_i32, %c0_i32_0 : i32, i32
  }
  func.func @transform_2(%arg0: i32) -> (i32, i32) {
    %c0_i32 = arith.constant 0 : i32
    %c0_i32_0 = arith.constant 0 : i32
    %c0_i32_1 = arith.constant 0 : i32
    return %c0_i32, %c0_i32_0 : i32, i32
  }
  func.func @transform_3(%arg0: i32) -> (i32, i32) {
    %c0_i32 = arith.constant 0 : i32
    %c0_i32_0 = arith.constant 0 : i32
    return %arg0, %c0_i32 : i32, i32
  }
}

module attributes {stable_mosaic.version = 11 : i64} {
  func.func @_attn_epilogue_kernel(%arg0: i32, %arg1: memref<1x1x32xf32, #tpu.memory_space<vmem>>, %arg2: memref<64x128xbf16, #tpu.memory_space<vmem>>, %arg3: memref<64x32xf32, #tpu.memory_space<vmem>>, %arg4: memref<32x128xbf16, #tpu.memory_space<vmem>>, %arg5: memref<1x128xf32, #tpu.memory_space<vmem>>, %arg6: memref<1x32xf32, #tpu.memory_space<vmem>>, %arg7: memref<1x32xf32, #tpu.memory_space<vmem>>, %arg8: memref<64x128xf32, #tpu.memory_space<vmem>>) attributes {dimension_semantics = [#tpu.dimension_semantics<parallel>], iteration_bounds = array<i64: 2>, scalar_prefetch = 0 : i64, scratch_operands = 0 : i64, tpu.core_type = #tpu.core_type<tc>, window_params = [{transform_indices = @transform_0, window_bounds = array<i64: 1, 1, 32>}, {transform_indices = @transform_1, window_bounds = array<i64: 64, 128>}, {transform_indices = @transform_2, window_bounds = array<i64: 64, 32>}, {pipeline_mode = #tpu.pipeline_mode<synchronous>, transform_indices = @transform_3, window_bounds = array<i64: 32, 128>}, {pipeline_mode = #tpu.pipeline_mode<synchronous>, transform_indices = @transform_4, window_bounds = array<i64: 1, 128>}, {pipeline_mode = #tpu.pipeline_mode<synchronous>, transform_indices = @transform_5, window_bounds = array<i64: 1, 32>}, {pipeline_mode = #tpu.pipeline_mode<synchronous>, transform_indices = @transform_6, window_bounds = array<i64: 1, 32>}, {transform_indices = @transform_7, window_bounds = array<i64: 64, 128>}]} {
    %c0 = arith.constant 0 : index
    %c0_0 = arith.constant 0 : index
    %0 = vector.load %arg2[%c0, %c0_0] : memref<64x128xbf16, #tpu.memory_space<vmem>>, vector<64x128xbf16>
    %1 = arith.extf %0 : vector<64x128xbf16> to vector<64x128xf32>
    %c0_1 = arith.constant 0 : index
    %c0_2 = arith.constant 0 : index
    %c0_3 = arith.constant 0 : index
    %2 = vector.load %arg1[%c0_1, %c0_2, %c0_3] : memref<1x1x32xf32, #tpu.memory_space<vmem>>, vector<1x1x32xf32>
    %3 = vector.shape_cast %2 : vector<1x1x32xf32> to vector<1x32xf32>
    %c0_4 = arith.constant 0 : index
    %c0_5 = arith.constant 0 : index
    %4 = vector.load %arg3[%c0_4, %c0_5] : memref<64x32xf32, #tpu.memory_space<vmem>>, vector<64x32xf32>
    %5 = vector.extract_strided_slice %3 {offsets = [0, 0], sizes = [1, 16], strides = [1, 1]} : vector<1x32xf32> to vector<1x16xf32>
    %6 = vector.extract_strided_slice %1 {offsets = [0, 0], sizes = [64, 16], strides = [1, 1]} : vector<64x128xf32> to vector<64x16xf32>
    %7 = vector.extract_strided_slice %1 {offsets = [0, 32], sizes = [64, 16], strides = [1, 1]} : vector<64x128xf32> to vector<64x16xf32>
    %8 = vector.extract_strided_slice %1 {offsets = [0, 64], sizes = [64, 16], strides = [1, 1]} : vector<64x128xf32> to vector<64x16xf32>
    %9 = vector.broadcast %5 : vector<1x16xf32> to vector<64x16xf32>
    %10 = arith.mulf %6, %9 : vector<64x16xf32>
    %cst = arith.constant dense<0.000000e+00> : vector<64xf32>
    %11 = vector.multi_reduction <add>, %10, %cst [1] : vector<64x16xf32> to vector<64xf32>
    %12 = vector.shape_cast %11 : vector<64xf32> to vector<64x1xf32>
    %cst_6 = arith.constant dense<0xFF800000> : vector<1xf32>
    %13 = vector.multi_reduction <maximumf>, %12, %cst_6 [0] : vector<64x1xf32> to vector<1xf32>
    %14 = vector.shape_cast %13 : vector<1xf32> to vector<1x1xf32>
    %15 = vector.broadcast %14 : vector<1x1xf32> to vector<64x1xf32>
    %16 = arith.subf %12, %15 : vector<64x1xf32>
    %17 = math.exp %16 : vector<64x1xf32>
    %cst_7 = arith.constant dense<0.000000e+00> : vector<1xf32>
    %18 = vector.multi_reduction <add>, %17, %cst_7 [0] : vector<64x1xf32> to vector<1xf32>
    %19 = vector.shape_cast %18 : vector<1xf32> to vector<1x1xf32>
    %20 = tpu.reciprocal %19 {approx = true} : vector<1x1xf32> -> vector<1x1xf32>
    %21 = vector.broadcast %20 : vector<1x1xf32> to vector<64x1xf32>
    %22 = arith.mulf %17, %21 : vector<64x1xf32>
    %23 = vector.broadcast %22 : vector<64x1xf32> to vector<64x16xf32>
    %24 = arith.mulf %23, %8 : vector<64x16xf32>
    %cst_8 = arith.constant dense<0.000000e+00> : vector<16xf32>
    %25 = vector.multi_reduction <add>, %24, %cst_8 [0] : vector<64x16xf32> to vector<16xf32>
    %26 = vector.shape_cast %25 : vector<16xf32> to vector<1x16xf32>
    %27 = vector.broadcast %5 : vector<1x16xf32> to vector<64x16xf32>
    %28 = arith.mulf %7, %27 : vector<64x16xf32>
    %cst_9 = arith.constant dense<0.000000e+00> : vector<64xf32>
    %29 = vector.multi_reduction <add>, %28, %cst_9 [1] : vector<64x16xf32> to vector<64xf32>
    %30 = vector.shape_cast %29 : vector<64xf32> to vector<64x1xf32>
    %31 = arith.negf %30 : vector<64x1xf32>
    %32 = math.exp %31 : vector<64x1xf32>
    %cst_10 = arith.constant 1.000000e+00 : f32
    %33 = vector.broadcast %cst_10 : f32 to vector<64x1xf32>
    %34 = arith.addf %33, %32 : vector<64x1xf32>
    %35 = arith.divf %33, %34 : vector<64x1xf32>
    %36 = vector.broadcast %35 : vector<64x1xf32> to vector<64x16xf32>
    %37 = vector.broadcast %26 : vector<1x16xf32> to vector<64x16xf32>
    %38 = arith.mulf %36, %37 : vector<64x16xf32>
    %39 = vector.extract_strided_slice %3 {offsets = [0, 16], sizes = [1, 16], strides = [1, 1]} : vector<1x32xf32> to vector<1x16xf32>
    %40 = vector.extract_strided_slice %1 {offsets = [0, 16], sizes = [64, 16], strides = [1, 1]} : vector<64x128xf32> to vector<64x16xf32>
    %41 = vector.extract_strided_slice %1 {offsets = [0, 48], sizes = [64, 16], strides = [1, 1]} : vector<64x128xf32> to vector<64x16xf32>
    %42 = vector.extract_strided_slice %1 {offsets = [0, 80], sizes = [64, 16], strides = [1, 1]} : vector<64x128xf32> to vector<64x16xf32>
    %43 = vector.broadcast %39 : vector<1x16xf32> to vector<64x16xf32>
    %44 = arith.mulf %40, %43 : vector<64x16xf32>
    %cst_11 = arith.constant dense<0.000000e+00> : vector<64xf32>
    %45 = vector.multi_reduction <add>, %44, %cst_11 [1] : vector<64x16xf32> to vector<64xf32>
    %46 = vector.shape_cast %45 : vector<64xf32> to vector<64x1xf32>
    %cst_12 = arith.constant dense<0xFF800000> : vector<1xf32>
    %47 = vector.multi_reduction <maximumf>, %46, %cst_12 [0] : vector<64x1xf32> to vector<1xf32>
    %48 = vector.shape_cast %47 : vector<1xf32> to vector<1x1xf32>
    %49 = vector.broadcast %48 : vector<1x1xf32> to vector<64x1xf32>
    %50 = arith.subf %46, %49 : vector<64x1xf32>
    %51 = math.exp %50 : vector<64x1xf32>
    %cst_13 = arith.constant dense<0.000000e+00> : vector<1xf32>
    %52 = vector.multi_reduction <add>, %51, %cst_13 [0] : vector<64x1xf32> to vector<1xf32>
    %53 = vector.shape_cast %52 : vector<1xf32> to vector<1x1xf32>
    %54 = tpu.reciprocal %53 {approx = true} : vector<1x1xf32> -> vector<1x1xf32>
    %55 = vector.broadcast %54 : vector<1x1xf32> to vector<64x1xf32>
    %56 = arith.mulf %51, %55 : vector<64x1xf32>
    %57 = vector.broadcast %56 : vector<64x1xf32> to vector<64x16xf32>
    %58 = arith.mulf %57, %42 : vector<64x16xf32>
    %cst_14 = arith.constant dense<0.000000e+00> : vector<16xf32>
    %59 = vector.multi_reduction <add>, %58, %cst_14 [0] : vector<64x16xf32> to vector<16xf32>
    %60 = vector.shape_cast %59 : vector<16xf32> to vector<1x16xf32>
    %61 = vector.broadcast %39 : vector<1x16xf32> to vector<64x16xf32>
    %62 = arith.mulf %41, %61 : vector<64x16xf32>
    %cst_15 = arith.constant dense<0.000000e+00> : vector<64xf32>
    %63 = vector.multi_reduction <add>, %62, %cst_15 [1] : vector<64x16xf32> to vector<64xf32>
    %64 = vector.shape_cast %63 : vector<64xf32> to vector<64x1xf32>
    %65 = arith.negf %64 : vector<64x1xf32>
    %66 = math.exp %65 : vector<64x1xf32>
    %cst_16 = arith.constant 1.000000e+00 : f32
    %67 = vector.broadcast %cst_16 : f32 to vector<64x1xf32>
    %68 = arith.addf %67, %66 : vector<64x1xf32>
    %69 = arith.divf %67, %68 : vector<64x1xf32>
    %70 = vector.broadcast %69 : vector<64x1xf32> to vector<64x16xf32>
    %71 = vector.broadcast %60 : vector<1x16xf32> to vector<64x16xf32>
    %72 = arith.mulf %70, %71 : vector<64x16xf32>
    %73 = tpu.concatenate %38, %72 in 1 : vector<64x16xf32>, vector<64x16xf32> -> vector<64x32xf32>
    %74 = arith.truncf %73 : vector<64x32xf32> to vector<64x32xbf16>
    %c0_17 = arith.constant 0 : index
    %c0_18 = arith.constant 0 : index
    %75 = vector.load %arg4[%c0_17, %c0_18] : memref<32x128xbf16, #tpu.memory_space<vmem>>, vector<32x128xbf16>
    %cst_19 = arith.constant dense<0.000000e+00> : vector<64x128xf32>
    %76 = tpu.matmul %74, %75, %cst_19 {dimension_numbers = #tpu.dot_dimension_numbers<[1], [0], [0], [1], [0, 0, 1, 1], [], []>} : vector<64x32xbf16>, vector<32x128xbf16>, vector<64x128xf32> -> vector<64x128xf32>
    %c0_20 = arith.constant 0 : index
    %c0_21 = arith.constant 0 : index
    %77 = vector.load %arg5[%c0_20, %c0_21] : memref<1x128xf32, #tpu.memory_space<vmem>>, vector<1x128xf32>
    %78 = vector.broadcast %77 : vector<1x128xf32> to vector<64x128xf32>
    %79 = arith.addf %76, %78 : vector<64x128xf32>
    %80 = vector.extract_strided_slice %79 {offsets = [0, 0], sizes = [64, 32], strides = [1, 1]} : vector<64x128xf32> to vector<64x32xf32>
    %c0_22 = arith.constant 0 : index
    %c0_23 = arith.constant 0 : index
    %81 = vector.load %arg6[%c0_22, %c0_23] : memref<1x32xf32, #tpu.memory_space<vmem>>, vector<1x32xf32>
    %82 = vector.broadcast %81 : vector<1x32xf32> to vector<64x32xf32>
    %83 = arith.mulf %80, %82 : vector<64x32xf32>
    %c0_24 = arith.constant 0 : index
    %c0_25 = arith.constant 0 : index
    %84 = vector.load %arg7[%c0_24, %c0_25] : memref<1x32xf32, #tpu.memory_space<vmem>>, vector<1x32xf32>
    %85 = vector.broadcast %84 : vector<1x32xf32> to vector<64x32xf32>
    %86 = arith.addf %83, %85 : vector<64x32xf32>
    %87 = arith.addf %86, %4 : vector<64x32xf32>
    %cst_26 = arith.constant 0.000000e+00 : f32
    %88 = vector.broadcast %cst_26 : f32 to vector<64x32xf32>
    %89 = arith.cmpf oge, %87, %88 : vector<64x32xf32>
    %cst_27 = arith.constant 1.000000e-01 : f32
    %90 = vector.broadcast %cst_27 : f32 to vector<64x32xf32>
    %91 = arith.mulf %90, %87 : vector<64x32xf32>
    %92 = arith.select %89, %87, %91 : vector<64x32xi1>, vector<64x32xf32>
    %93 = vector.extract_strided_slice %79 {offsets = [0, 32], sizes = [64, 96], strides = [1, 1]} : vector<64x128xf32> to vector<64x96xf32>
    %94 = tpu.concatenate %92, %93 in 1 : vector<64x32xf32>, vector<64x96xf32> -> vector<64x128xf32>
    %c0_28 = arith.constant 0 : index
    %c0_29 = arith.constant 0 : index
    %95 = vector.load %arg8[%c0_28, %c0_29] : memref<64x128xf32, #tpu.memory_space<vmem>>, vector<64x128xf32>
    tpu.vector_store %arg8[%c0_28, %c0_29], %94 {strides = array<i32>} : memref<64x128xf32, #tpu.memory_space<vmem>>, vector<64x128xf32>,
    return
  }
  func.func @transform_0(%arg0: i32) -> (i32, i32, i32) {
    %c0_i32 = arith.constant 0 : i32
    %c0_i32_0 = arith.constant 0 : i32
    %c0_i32_1 = arith.constant 0 : i32
    return %arg0, %c0_i32, %c0_i32_0 : i32, i32, i32
  }
  func.func @transform_1(%arg0: i32) -> (i32, i32) {
    %c0_i32 = arith.constant 0 : i32
    %c0_i32_0 = arith.constant 0 : i32
    return %arg0, %c0_i32 : i32, i32
  }
  func.func @transform_2(%arg0: i32) -> (i32, i32) {
    %c0_i32 = arith.constant 0 : i32
    %c0_i32_0 = arith.constant 0 : i32
    return %arg0, %c0_i32 : i32, i32
  }
  func.func @transform_3(%arg0: i32) -> (i32, i32) {
    %c0_i32 = arith.constant 0 : i32
    %c0_i32_0 = arith.constant 0 : i32
    %c0_i32_1 = arith.constant 0 : i32
    return %c0_i32, %c0_i32_0 : i32, i32
  }
  func.func @transform_4(%arg0: i32) -> (i32, i32) {
    %c0_i32 = arith.constant 0 : i32
    %c0_i32_0 = arith.constant 0 : i32
    %c0_i32_1 = arith.constant 0 : i32
    return %c0_i32, %c0_i32_0 : i32, i32
  }
  func.func @transform_5(%arg0: i32) -> (i32, i32) {
    %c0_i32 = arith.constant 0 : i32
    %c0_i32_0 = arith.constant 0 : i32
    %c0_i32_1 = arith.constant 0 : i32
    return %c0_i32, %c0_i32_0 : i32, i32
  }
  func.func @transform_6(%arg0: i32) -> (i32, i32) {
    %c0_i32 = arith.constant 0 : i32
    %c0_i32_0 = arith.constant 0 : i32
    %c0_i32_1 = arith.constant 0 : i32
    return %c0_i32, %c0_i32_0 : i32, i32
  }
  func.func @transform_7(%arg0: i32) -> (i32, i32) {
    %c0_i32 = arith.constant 0 : i32
    %c0_i32_0 = arith.constant 0 : i32
    return %arg0, %c0_i32 : i32, i32
  }
}

</mosaic_0001>

<llo_original>
// kernel: garan_attention_forward.2
$region0: #{garan_attention_forward.2}
  #allocation0 [shape = 'u32[]', space=smem, size = 0x4, offset = 0x4, fixed_abs, tag = 'smem constant byte address 0x4 - core index']
  #allocation1 [shape = 'u32[144,128]{1,0:T(1,128)}', space=vmem, size = 0x12000, scoped, tag = 'internal scratch']
  %s0 = inlined_call_operand.vmem [shape: bf16[128,32], index: 0, kind: input, shape index: {}]
  %s1 = inlined_call_operand.vmem [shape: bf16[32,128], index: 1, kind: input, shape index: {}]
  %s2 = inlined_call_operand.vmem [shape: f32[1,128], index: 2, kind: input, shape index: {}]
  %s3 = inlined_call_operand.vmem [shape: bf16[128,128], index: 3, kind: output, shape index: {}]
  %s4 = sld [smem:[#allocation0]]
  $region22: #{garan_attention_forward.2} parent=0
    _
  %s6 = ssub.s32 1, %s4
  %s7 = scalar_select 0, %s6, %s4
  // Predicated region
  $region2: #{garan_attention_forward.2} parent=0 // pred_check
    _
  $region3: #{garan_attention_forward.2} parent=0 // pred_check_branch
    %9 = sbr.rel (0) target = $region5
  $region4: #{garan_attention_forward.2} parent=0 // pred_region
    _
  $region5: #{garan_attention_forward.2} parent=0 // pred_fallthru
    _
  // Predicated region
  $region6: #{garan_attention_forward.2} parent=0 // pred_check
    _
  $region7: #{garan_attention_forward.2} parent=0 // pred_check_branch
    %11 = sbr.rel (0) target = $region9
  $region8: #{garan_attention_forward.2} parent=0 // pred_region
    _
  $region9: #{garan_attention_forward.2} parent=0 // pred_fallthru
    _
  // Predicated region
  $region10: #{garan_attention_forward.2} parent=0 // pred_check
    _
  $region11: #{garan_attention_forward.2} parent=0 // pred_check_branch
    %13 = sbr.rel (0) target = $region13
  $region12: #{garan_attention_forward.2} parent=0 // pred_region
    _
  $region13: #{garan_attention_forward.2} parent=0 // pred_fallthru
    _
  %v15 = vld [vmem:[%s0] sm:$0xf]
  %v16 = vld [vmem:[%s0 + $0x4] sm:$0xf]
  %v17 = vld [vmem:[%s0 + $0x8] sm:$0xf]
  %v18 = vld [vmem:[%s0 + $0xc] sm:$0xf]
  %v19 = vld [vmem:[%s0 + $0x10] sm:$0xf]
  %v20 = vld [vmem:[%s0 + $0x14] sm:$0xf]
  %v21 = vld [vmem:[%s0 + $0x18] sm:$0xf]
  %v22 = vld [vmem:[%s0 + $0x1c] sm:$0xf]
  %v23 = vld [vmem:[%s0 + $0x20] sm:$0xf]
  %v24 = vld [vmem:[%s0 + $0x24] sm:$0xf]
  %v25 = vld [vmem:[%s0 + $0x28] sm:$0xf]
  %v26 = vld [vmem:[%s0 + $0x2c] sm:$0xf]
  %v27 = vld [vmem:[%s0 + $0x30] sm:$0xf]
  %v28 = vld [vmem:[%s0 + $0x34] sm:$0xf]
  %v29 = vld [vmem:[%s0 + $0x38] sm:$0xf]
  %v30 = vld [vmem:[%s0 + $0x3c] sm:$0xf]
  %v31 = vld [vmem:[%s1] sm:$0xf]
  %v32 = vld [vmem:[%s1 + $0x4] sm:$0xf]
  %v33 = vld [vmem:[%s1 + $0x8] sm:$0xf]
  %v34 = vld [vmem:[%s1 + $0xc] sm:$0xf]
  %v35 = vld [vmem:[%s2] sm:$0x1]
  %v37 = vlaneseq
  %v38 = vshrl.u32 %v37, 7
  %v39 = vsub.s32 0, %v38
  %v40 = vrot.slane %v35, %v39
  %v58 = vunpack.c.l.b16 %v15
  %v59 = vunpack.c.l.b16 %v16
  %v60 = vunpack.c.l.b16 %v17
  %v61 = vunpack.c.l.b16 %v18
  %v62 = vunpack.c.l.b16 %v19
  %v63 = vunpack.c.l.b16 %v20
  %v64 = vunpack.c.l.b16 %v21
  %v65 = vunpack.c.l.b16 %v22
  %v66 = vunpack.c.l.b16 %v23
  %v67 = vunpack.c.l.b16 %v24
  %v68 = vunpack.c.l.b16 %v25
  %v69 = vunpack.c.l.b16 %v26
  %v70 = vunpack.c.l.b16 %v27
  %v71 = vunpack.c.l.b16 %v28
  %v72 = vunpack.c.l.b16 %v29
  %v73 = vunpack.c.l.b16 %v30
  %v74 = vpack.c.b16 %v59, %v58
  %v75 = vpack.c.b16 %v61, %v60
  %v76 = vpack.c.b16 %v63, %v62
  %v77 = vpack.c.b16 %v65, %v64
  %v78 = vpack.c.b16 %v67, %v66
  %v79 = vpack.c.b16 %v69, %v68
  %v80 = vpack.c.b16 %v71, %v70
  %v81 = vpack.c.b16 %v73, %v72
  %v86 = vunpack.c.l.b16 %v31
  %v87 = vunpack.c.l.b16 %v32
  %v88 = vunpack.c.l.b16 %v33
  %v89 = vunpack.c.l.b16 %v34
  %v90 = vpack.c.b16 %v87, %v86
  %v91 = vpack.c.b16 %v89, %v88
  %vm94 = vcmask 261120
  %v96 = vsel %vm94, %v74, 0
  %v99 = vsel %vm94, %v75, 0
  %v102 = vsel %vm94, %v76, 0
  %v105 = vsel %vm94, %v77, 0
  %v108 = vsel %vm94, %v78, 0
  %v111 = vsel %vm94, %v79, 0
  %v114 = vsel %vm94, %v80, 0
  %v117 = vsel %vm94, %v81, 0
  %119 = vmatprep.subr.bf16.mxu0 0
  %120 = vmatpush1.bf16.msra.mxu0 %v90
  %121 = vmatprep.subr.bf16.mxu0 0
  %122 = vmatpush1.bf16.msra.mxu0 %v91
  %123 = vmatprep.subr.bf16.mxu0 0
  %124 = vmatpush1.bf16.msra.mxu0 0
  %125 = vmatprep.subr.bf16.mxu0 0
  %126 = vmatpush1.bf16.msra.mxu0 0
  %127 = vmatprep.subr.bf16.mxu0 0
  %128 = vmatpush1.bf16.msra.mxu0 0
  %129 = vmatprep.subr.bf16.mxu0 0
  %130 = vmatpush1.bf16.msra.mxu0 0
  %131 = vmatprep.subr.bf16.mxu0 0
  %132 = vmatpush1.bf16.msra.mxu0 0
  %133 = vmatprep.subr.bf16.mxu0 0
  %134 = vmatpush1.bf16.msra.mxu0 0
  %135 = vmatprep.subr.bf16.mxu0 0
  %136 = vmatpush1.bf16.msra.mxu0 0
  %137 = vmatprep.subr.bf16.mxu0 0
  %138 = vmatpush1.bf16.msra.mxu0 0
  %139 = vmatprep.subr.bf16.mxu0 0
  %140 = vmatpush1.bf16.msra.mxu0 0
  %141 = vmatprep.subr.bf16.mxu0 0
  %142 = vmatpush1.bf16.msra.mxu0 0
  %143 = vmatprep.subr.bf16.mxu0 0
  %144 = vmatpush1.bf16.msra.mxu0 0
  %145 = vmatprep.subr.bf16.mxu0 0
  %146 = vmatpush1.bf16.msra.mxu0 0
  %147 = vmatprep.subr.bf16.mxu0 0
  %148 = vmatpush1.bf16.msra.mxu0 0
  %149 = vmatprep.subr.bf16.mxu0 0
  %150 = vmatpush1.bf16.msra.mxu0 0
  %151 = vmatprep.mubr.bf16.mxu0 0
  %152 = vmatmul.mubr.bf16.gmra.mrb[0].mxu0 %v96
  %v153 = vpop.f32.mrb[0].mxu0
  %v154 = vadd.f32 %v40, %v153
  %v155 = vpop.f32.mrb[0].mxu0
  %v156 = vpop.f32.mrb[0].mxu0
  %v157 = vadd.f32 %v40, %v156
  %v158 = vpop.f32.mrb[0].mxu0
  %159 = vmatprep.mubr.bf16.mxu0 0
  %160 = vmatmul.mubr.bf16.gmra.mrb[0].mxu0 %v99
  %v161 = vpop.f32.mrb[0].mxu0
  %v162 = vadd.f32 %v40, %v161
  %v163 = vpop.f32.mrb[0].mxu0
  %v164 = vpop.f32.mrb[0].mxu0
  %v165 = vadd.f32 %v40, %v164
  %v166 = vpop.f32.mrb[0].mxu0
  %167 = vmatprep.mubr.bf16.mxu0 0
  %168 = vmatmul.mubr.bf16.gmra.mrb[0].mxu0 %v102
  %v169 = vpop.f32.mrb[0].mxu0
  %v170 = vadd.f32 %v40, %v169
  %v171 = vpop.f32.mrb[0].mxu0
  %v172 = vpop.f32.mrb[0].mxu0
  %v173 = vadd.f32 %v40, %v172
  %v174 = vpop.f32.mrb[0].mxu0
  %175 = vmatprep.mubr.bf16.mxu0 0
  %176 = vmatmul.mubr.bf16.gmra.mrb[0].mxu0 %v105
  %v177 = vpop.f32.mrb[0].mxu0
  %v178 = vadd.f32 %v40, %v177
  %v179 = vpop.f32.mrb[0].mxu0
  %v180 = vpop.f32.mrb[0].mxu0
  %v181 = vadd.f32 %v40, %v180
  %v182 = vpop.f32.mrb[0].mxu0
  %183 = vmatprep.mubr.bf16.mxu0 0
  %184 = vmatmul.mubr.bf16.gmra.mrb[0].mxu0 %v108
  %v185 = vpop.f32.mrb[0].mxu0
  %v186 = vadd.f32 %v40, %v185
  %v187 = vpop.f32.mrb[0].mxu0
  %v188 = vpop.f32.mrb[0].mxu0
  %v189 = vadd.f32 %v40, %v188
  %v190 = vpop.f32.mrb[0].mxu0
  %191 = vmatprep.mubr.bf16.mxu0 0
  %192 = vmatmul.mubr.bf16.gmra.mrb[0].mxu0 %v111
  %v193 = vpop.f32.mrb[0].mxu0
  %v194 = vadd.f32 %v40, %v193
  %v195 = vpop.f32.mrb[0].mxu0
  %v196 = vpop.f32.mrb[0].mxu0
  %v197 = vadd.f32 %v40, %v196
  %v198 = vpop.f32.mrb[0].mxu0
  %199 = vmatprep.mubr.bf16.mxu0 0
  %200 = vmatmul.mubr.bf16.gmra.mrb[0].mxu0 %v114
  %v201 = vpop.f32.mrb[0].mxu0
  %v202 = vadd.f32 %v40, %v201
  %v203 = vpop.f32.mrb[0].mxu0
  %v204 = vpop.f32.mrb[0].mxu0
  %v205 = vadd.f32 %v40, %v204
  %v206 = vpop.f32.mrb[0].mxu0
  %207 = vmatprep.mubr.bf16.mxu0 0
  %208 = vmatmul.mubr.bf16.gmra.mrb[0].mxu0 %v117
  %v209 = vpop.f32.mrb[0].mxu0
  %v210 = vadd.f32 %v40, %v209
  %v211 = vpop.f32.mrb[0].mxu0
  %v212 = vpop.f32.mrb[0].mxu0
  %v213 = vadd.f32 %v40, %v212
  %v214 = vpop.f32.mrb[0].mxu0
  %215 = vdwg.mxu0
  %v216 = vpack.c.bf16 %v157, %v154
  %v217 = vpack.c.bf16 %v165, %v162
  %v218 = vpack.c.bf16 %v173, %v170
  %v219 = vpack.c.bf16 %v181, %v178
  %v220 = vpack.c.bf16 %v189, %v186
  %v221 = vpack.c.bf16 %v197, %v194
  %v222 = vpack.c.bf16 %v205, %v202
  %v223 = vpack.c.bf16 %v213, %v210
  %v232 = vunpack.c.l.b16 %v216
  %v233 = vunpack.c.h.b16 %v216
  %v234 = vunpack.c.l.b16 %v217
  %v235 = vunpack.c.h.b16 %v217
  %v236 = vunpack.c.l.b16 %v218
  %v237 = vunpack.c.h.b16 %v218
  %v238 = vunpack.c.l.b16 %v219
  %v239 = vunpack.c.h.b16 %v219
  %v240 = vunpack.c.l.b16 %v220
  %v241 = vunpack.c.h.b16 %v220
  %v242 = vunpack.c.l.b16 %v221
  %v243 = vunpack.c.h.b16 %v221
  %v244 = vunpack.c.l.b16 %v222
  %v245 = vunpack.c.h.b16 %v222
  %v246 = vunpack.c.l.b16 %v223
  %v247 = vunpack.c.h.b16 %v223
  %v248 = vpack.c.b16 %v232, %v232
  %v249 = vpack.c.b16 %v233, %v233
  %v250 = vpack.c.b16 %v234, %v234
  %v251 = vpack.c.b16 %v235, %v235
  %v252 = vpack.c.b16 %v236, %v236
  %v253 = vpack.c.b16 %v237, %v237
  %v254 = vpack.c.b16 %v238, %v238
  %v255 = vpack.c.b16 %v239, %v239
  %v256 = vpack.c.b16 %v240, %v240
  %v257 = vpack.c.b16 %v241, %v241
  %v258 = vpack.c.b16 %v242, %v242
  %v259 = vpack.c.b16 %v243, %v243
  %v260 = vpack.c.b16 %v244, %v244
  %v261 = vpack.c.b16 %v245, %v245
  %v262 = vpack.c.b16 %v246, %v246
  %v263 = vpack.c.b16 %v247, %v247
  %280 = vst [vmem:[%s3] sm:$0xf] %v248
  %281 = vst [vmem:[%s3 + $0x4] sm:$0xf] %v249
  %282 = vst [vmem:[%s3 + $0x8] sm:$0xf] %v250
  %283 = vst [vmem:[%s3 + $0xc] sm:$0xf] %v251
  %284 = vst [vmem:[%s3 + $0x10] sm:$0xf] %v252
  %285 = vst [vmem:[%s3 + $0x14] sm:$0xf] %v253
  %286 = vst [vmem:[%s3 + $0x18] sm:$0xf] %v254
  %287 = vst [vmem:[%s3 + $0x1c] sm:$0xf] %v255
  %288 = vst [vmem:[%s3 + $0x20] sm:$0xf] %v256
  %289 = vst [vmem:[%s3 + $0x24] sm:$0xf] %v257
  %290 = vst [vmem:[%s3 + $0x28] sm:$0xf] %v258
  %291 = vst [vmem:[%s3 + $0x2c] sm:$0xf] %v259
  %292 = vst [vmem:[%s3 + $0x30] sm:$0xf] %v260
  %293 = vst [vmem:[%s3 + $0x34] sm:$0xf] %v261
  %294 = vst [vmem:[%s3 + $0x38] sm:$0xf] %v262
  %295 = vst [vmem:[%s3 + $0x3c] sm:$0xf] %v263
  // Predicated region
  $region14: #{garan_attention_forward.2} parent=0 // pred_check
    _
  $region15: #{garan_attention_forward.2} parent=0 // pred_check_branch
    %297 = sbr.rel (0) target = $region17
  $region16: #{garan_attention_forward.2} parent=0 // pred_region
    _
  $region17: #{garan_attention_forward.2} parent=0 // pred_fallthru
    _
  // Predicated region
  $region18: #{garan_attention_forward.2} parent=0 // pred_check
    _
  $region19: #{garan_attention_forward.2} parent=0 // pred_check_branch
    %299 = sbr.rel (0) target = $region21
  $region20: #{garan_attention_forward.2} parent=0 // pred_region
    _
  $region21: #{garan_attention_forward.2} parent=0 // pred_fallthru
    _

// kernel: garan_attention_forward.3
$region0: #{garan_attention_forward.3}
  #allocation0 [shape = 'u32[]', space=smem, size = 0x4, offset = 0x4, fixed_abs, tag = 'smem constant byte address 0x4 - core index']
  #allocation1 [shape = 'u32[144,128]{1,0:T(1,128)}', space=vmem, size = 0x12000, scoped, tag = 'internal scratch']
  %s0 = inlined_call_operand.vmem [shape: f32[2,1,32], index: 0, kind: input, shape index: {}]
  %s1 = inlined_call_operand.vmem [shape: bf16[128,128], index: 1, kind: input, shape index: {}]
  %s2 = inlined_call_operand.vmem [shape: f32[128,32], index: 2, kind: input, shape index: {}]
  %s3 = inlined_call_operand.vmem [shape: bf16[32,128], index: 3, kind: input, shape index: {}]
  %s4 = inlined_call_operand.vmem [shape: f32[1,128], index: 4, kind: input, shape index: {}]
  %s5 = inlined_call_operand.vmem [shape: f32[1,32], index: 5, kind: input, shape index: {}]
  %s6 = inlined_call_operand.vmem [shape: f32[1,32], index: 6, kind: input, shape index: {}]
  %s7 = inlined_call_operand.vmem [shape: f32[128,128], index: 7, kind: output, shape index: {}]
  %s8 = sld [smem:[#allocation0]]
  $region61: #{garan_attention_forward.3} parent=0
    _
  %s10 = ssub.s32 1, %s8
  %s11 = scalar_select 0, %s10, %s8
  loop: start=0, step=1, limit=4
  $region2: #{garan_attention_forward.3} parent=0 // loop_pre_header
    _
  $region3: #{garan_attention_forward.3} parent=0 // loop_header
    %s13 = sphi 0, %s17
    %p14 = scmp.ge.s32.totalorder %s13, 4
    %s23 = sphi 0, %s25
    %s26 = sphi 0, %s23
    %s27 = sphi 0, %s26
    %s43 = sphi 0, %s27
    %s49 = sphi 0, %s51
    %s52 = sphi 0, %s49
    %s53 = sphi 0, %s52
    %s69 = sphi 0, %s53
    %s75 = sphi 0, %s77
    %s78 = sphi 0, %s75
    %s79 = sphi 0, %s78
    %s95 = sphi 0, %s79
    %s99 = sphi 0, %s99
    %s101 = sphi 0, %s99
    %s102 = sphi 0, %s101
    %s116 = sphi 0, %s102
    %s120 = sphi 0, %s120
    %s122 = sphi 0, %s120
    %s123 = sphi 0, %s122
    %s137 = sphi 0, %s123
    %s141 = sphi 0, %s141
    %s143 = sphi 0, %s141
    %s144 = sphi 0, %s143
    %s158 = sphi 0, %s144
    %s162 = sphi 0, %s162
    %s164 = sphi 0, %s162
    %s165 = sphi 0, %s164
    %s179 = sphi 0, %s165
    %s185 = sphi 0, %s187
    %s188 = sphi 0, %s185
    %s189 = sphi 0, %s188
    %s205 = sphi 0, %s189
  $region4: #{garan_attention_forward.3} parent=0 // loop_header_branch
    %16 = sbr.rel (%p14) target = $region8
  $region5: #{garan_attention_forward.3} parent=0 // loop_body
    %s18 = ssub.s32 %s13, 1
    %s19 = ssub.s32 %s13, 2
    %s20 = sadd.s32 %s13, 1
    %s21 = ssub.s32 %s13, %s20
    %p22 = scmp.eq.s32.totalorder %s21, 0
    %s24 = sadd.s32 %s23, 1
    %s25 = scalar_select %p22, %s23, %s24
    %p28 = pneg %p22
    %p29 = scmp.eq.s32.totalorder %s13, 1
    %p30 = por %p28, %p29
    %p31 = scmp.ne.s32.totalorder %s23, %s26
    %p32 = scmp.eq.s32.totalorder %s13, 0
    %p33 = por %p31, %p32
    %p34 = scmp.ne.s32.totalorder %s23, %s26
    %p35 = scmp.eq.s32.totalorder %s18, 1
    %p36 = por %p34, %p35
    %p37 = scmp.ne.s32.totalorder %s26, %s27
    %p38 = scmp.eq.s32.totalorder %s18, 0
    %p39 = por %p37, %p38
    %p40 = scmp.ne.s32.totalorder %s26, %s27
    %p41 = scmp.eq.s32.totalorder %s19, 1
    %p42 = por %p40, %p41
    %p44 = scmp.ne.s32.totalorder %s27, %s43
    %p45 = scmp.eq.s32.totalorder %s19, 0
    %p46 = por %p44, %p45
    %s47 = ssub.s32 %s13, %s20
    %p48 = scmp.eq.s32.totalorder %s47, 0
    %s50 = sadd.s32 %s49, 1
    %s51 = scalar_select %p48, %s49, %s50
    %p54 = pneg %p48
    %p55 = scmp.eq.s32.totalorder %s13, 1
    %p56 = por %p54, %p55
    %p57 = scmp.ne.s32.totalorder %s49, %s52
    %p58 = scmp.eq.s32.totalorder %s13, 0
    %p59 = por %p57, %p58
    %p60 = scmp.ne.s32.totalorder %s49, %s52
    %p61 = scmp.eq.s32.totalorder %s18, 1
    %p62 = por %p60, %p61
    %p63 = scmp.ne.s32.totalorder %s52, %s53
    %p64 = scmp.eq.s32.totalorder %s18, 0
    %p65 = por %p63, %p64
    %p66 = scmp.ne.s32.totalorder %s52, %s53
    %p67 = scmp.eq.s32.totalorder %s19, 1
    %p68 = por %p66, %p67
    %p70 = scmp.ne.s32.totalorder %s53, %s69
    %p71 = scmp.eq.s32.totalorder %s19, 0
    %p72 = por %p70, %p71
    %s73 = ssub.s32 %s13, %s20
    %p74 = scmp.eq.s32.totalorder %s73, 0
    %s76 = sadd.s32 %s75, 1
    %s77 = scalar_select %p74, %s75, %s76
    %p80 = pneg %p74
    %p81 = scmp.eq.s32.totalorder %s13, 1
    %p82 = por %p80, %p81
    %p83 = scmp.ne.s32.totalorder %s75, %s78
    %p84 = scmp.eq.s32.totalorder %s13, 0
    %p85 = por %p83, %p84
    %p86 = scmp.ne.s32.totalorder %s75, %s78
    %p87 = scmp.eq.s32.totalorder %s18, 1
    %p88 = por %p86, %p87
    %p89 = scmp.ne.s32.totalorder %s78, %s79
    %p90 = scmp.eq.s32.totalorder %s18, 0
    %p91 = por %p89, %p90
    %p92 = scmp.ne.s32.totalorder %s78, %s79
    %p93 = scmp.eq.s32.totalorder %s19, 1
    %p94 = por %p92, %p93
    %p96 = scmp.ne.s32.totalorder %s79, %s95
    %p97 = scmp.eq.s32.totalorder %s19, 0
    %p98 = por %p96, %p97
    %s100 = sadd.s32 %s99, 1
    %p103 = scmp.eq.s32.totalorder %s13, 1
    %p104 = scmp.ne.s32.totalorder %s99, %s101
    %p105 = scmp.eq.s32.totalorder %s13, 0
    %p106 = por %p104, %p105
    %p107 = scmp.ne.s32.totalorder %s99, %s101
    %p108 = scmp.eq.s32.totalorder %s18, 1
    %p109 = por %p107, %p108
    %p110 = scmp.ne.s32.totalorder %s101, %s102
    %p111 = scmp.eq.s32.totalorder %s18, 0
    %p112 = por %p110, %p111
    %p113 = scmp.ne.s32.totalorder %s101, %s102
    %p114 = scmp.eq.s32.totalorder %s19, 1
    %p115 = por %p113, %p114
    %p117 = scmp.ne.s32.totalorder %s102, %s116
    %p118 = scmp.eq.s32.totalorder %s19, 0
    %p119 = por %p117, %p118
    %s121 = sadd.s32 %s120, 1
    %p124 = scmp.eq.s32.totalorder %s13, 1
    %p125 = scmp.ne.s32.totalorder %s120, %s122
    %p126 = scmp.eq.s32.totalorder %s13, 0
    %p127 = por %p125, %p126
    %p128 = scmp.ne.s32.totalorder %s120, %s122
    %p129 = scmp.eq.s32.totalorder %s18, 1
    %p130 = por %p128, %p129
    %p131 = scmp.ne.s32.totalorder %s122, %s123
    %p132 = scmp.eq.s32.totalorder %s18, 0
    %p133 = por %p131, %p132
    %p134 = scmp.ne.s32.totalorder %s122, %s123
    %p135 = scmp.eq.s32.totalorder %s19, 1
    %p136 = por %p134, %p135
    %p138 = scmp.ne.s32.totalorder %s123, %s137
    %p139 = scmp.eq.s32.totalorder %s19, 0
    %p140 = por %p138, %p139
    %s142 = sadd.s32 %s141, 1
    %p145 = scmp.eq.s32.totalorder %s13, 1
    %p146 = scmp.ne.s32.totalorder %s141, %s143
    %p147 = scmp.eq.s32.totalorder %s13, 0
    %p148 = por %p146, %p147
    %p149 = scmp.ne.s32.totalorder %s141, %s143
    %p150 = scmp.eq.s32.totalorder %s18, 1
    %p151 = por %p149, %p150
    %p152 = scmp.ne.s32.totalorder %s143, %s144
    %p153 = scmp.eq.s32.totalorder %s18, 0
    %p154 = por %p152, %p153
    %p155 = scmp.ne.s32.totalorder %s143, %s144
    %p156 = scmp.eq.s32.totalorder %s19, 1
    %p157 = por %p155, %p156
    %p159 = scmp.ne.s32.totalorder %s144, %s158
    %p160 = scmp.eq.s32.totalorder %s19, 0
    %p161 = por %p159, %p160
    %s163 = sadd.s32 %s162, 1
    %p166 = scmp.eq.s32.totalorder %s13, 1
    %p167 = scmp.ne.s32.totalorder %s162, %s164
    %p168 = scmp.eq.s32.totalorder %s13, 0
    %p169 = por %p167, %p168
    %p170 = scmp.ne.s32.totalorder %s162, %s164
    %p171 = scmp.eq.s32.totalorder %s18, 1
    %p172 = por %p170, %p171
    %p173 = scmp.ne.s32.totalorder %s164, %s165
    %p174 = scmp.eq.s32.totalorder %s18, 0
    %p175 = por %p173, %p174
    %p176 = scmp.ne.s32.totalorder %s164, %s165
    %p177 = scmp.eq.s32.totalorder %s19, 1
    %p178 = por %p176, %p177
    %p180 = scmp.ne.s32.totalorder %s165, %s179
    %p181 = scmp.eq.s32.totalorder %s19, 0
    %p182 = por %p180, %p181
    %s183 = ssub.s32 %s13, %s20
    %p184 = scmp.eq.s32.totalorder %s183, 0
    %s186 = sadd.s32 %s185, 1
    %s187 = scalar_select %p184, %s185, %s186
    %p190 = pneg %p184
    %p191 = scmp.eq.s32.totalorder %s13, 1
    %p192 = por %p190, %p191
    %p193 = scmp.ne.s32.totalorder %s185, %s188
    %p194 = scmp.eq.s32.totalorder %s13, 0
    %p195 = por %p193, %p194
    %p196 = scmp.ne.s32.totalorder %s185, %s188
    %p197 = scmp.eq.s32.totalorder %s18, 1
    %p198 = por %p196, %p197
    %p199 = scmp.ne.s32.totalorder %s188, %s189
    %p200 = scmp.eq.s32.totalorder %s18, 0
    %p201 = por %p199, %p200
    %p202 = scmp.ne.s32.totalorder %s188, %s189
    %p203 = scmp.eq.s32.totalorder %s19, 1
    %p204 = por %p202, %p203
    %p206 = scmp.ne.s32.totalorder %s189, %s205
    %p207 = scmp.eq.s32.totalorder %s19, 0
    %p208 = por %p206, %p207
    %p209 = scmp.le.s32.totalorder 1, %s13
    %p210 = scmp.lt.s32.totalorder %s13, 3
    %p211 = pnand %p209, %p210
    %p212 = pneg %p211
    // Predicated region
    $region9: #{garan_attention_forward.3} parent=5 // pred_check
      _
    $region10: #{garan_attention_forward.3} parent=5 // pred_check_branch
      %214 = sbr.rel (%p211) target = $region12
    $region11: #{garan_attention_forward.3} parent=5 // pred_region
      %s215 = ssub.s32 %s13, 1
      // Predicated region
      $region13: #{garan_attention_forward.3} parent=11 // pred_check
        %p216 = pneg %p112
      $region14: #{garan_attention_forward.3} parent=11 // pred_check_branch
        %218 = sbr.rel (%p216) target = $region16
      $region15: #{garan_attention_forward.3} parent=11 // pred_region
        _
      $region16: #{garan_attention_forward.3} parent=11 // pred_fallthru
        _
      // Predicated region
      $region17: #{garan_attention_forward.3} parent=11 // pred_check
        %p219 = pneg %p133
      $region18: #{garan_attention_forward.3} parent=11 // pred_check_branch
        %221 = sbr.rel (%p219) target = $region20
      $region19: #{garan_attention_forward.3} parent=11 // pred_region
        _
      $region20: #{garan_attention_forward.3} parent=11 // pred_fallthru
        _
      // Predicated region
      $region21: #{garan_attention_forward.3} parent=11 // pred_check
        %p222 = pneg %p154
      $region22: #{garan_attention_forward.3} parent=11 // pred_check_branch
        %224 = sbr.rel (%p222) target = $region24
      $region23: #{garan_attention_forward.3} parent=11 // pred_region
        _
      $region24: #{garan_attention_forward.3} parent=11 // pred_fallthru
        _
      // Predicated region
      $region25: #{garan_attention_forward.3} parent=11 // pred_check
        %p225 = pneg %p175
      $region26: #{garan_attention_forward.3} parent=11 // pred_check_branch
        %227 = sbr.rel (%p225) target = $region28
      $region27: #{garan_attention_forward.3} parent=11 // pred_region
        _
      $region28: #{garan_attention_forward.3} parent=11 // pred_fallthru
        _
    $region12: #{garan_attention_forward.3} parent=5 // pred_fallthru
      _
    %p228 = scmp.lt.s32.totalorder %s13, 2
    // Predicated region
    $region29: #{garan_attention_forward.3} parent=5 // pred_check
      %p229 = pneg %p228
    $region30: #{garan_attention_forward.3} parent=5 // pred_check_branch
      %231 = sbr.rel (%p229) target = $region32
    $region31: #{garan_attention_forward.3} parent=5 // pred_region
      // Predicated region
      $region33: #{garan_attention_forward.3} parent=31 // pred_check
        %p232 = pneg %p33
      $region34: #{garan_attention_forward.3} parent=31 // pred_check_branch
        %234 = sbr.rel (%p232) target = $region36
      $region35: #{garan_attention_forward.3} parent=31 // pred_region
        %p235 = scmp.lt.s32.totalorder %s13, 1
        %s236 = scalar_select %p235, %s13, 1
        %s237 = scalar_lea.vmem %s0, %s236
      $region36: #{garan_attention_forward.3} parent=31 // pred_fallthru
        _
      // Predicated region
      $region37: #{garan_attention_forward.3} parent=31 // pred_check
        %p238 = pneg %p59
      $region38: #{garan_attention_forward.3} parent=31 // pred_check_branch
        %240 = sbr.rel (%p238) target = $region40
      $region39: #{garan_attention_forward.3} parent=31 // pred_region
        %s241 = smul.u32 8, %s13
        %p242 = scmp.lt.s32.totalorder %s241, 15
        %s243 = scalar_select %p242, %s241, 15
        %s244 = smul.addr %s243, 4
        %s245 = scalar_lea.vmem %s1, %s244
        %s246 = smul.u32 8, %s13
      $region40: #{garan_attention_forward.3} parent=31 // pred_fallthru
        _
      // Predicated region
      $region41: #{garan_attention_forward.3} parent=31 // pred_check
        %p247 = pneg %p85
      $region42: #{garan_attention_forward.3} parent=31 // pred_check_branch
        %249 = sbr.rel (%p247) target = $region44
      $region43: #{garan_attention_forward.3} parent=31 // pred_region
        %s250 = smul.u32 8, %s13
        %p251 = scmp.lt.s32.totalorder %s250, 15
        %s252 = scalar_select %p251, %s250, 15
        %s253 = smul.addr %s252, 8
        %s254 = scalar_lea.vmem %s2, %s253
        %s255 = smul.u32 8, %s13
      $region44: #{garan_attention_forward.3} parent=31 // pred_fallthru
        _
    $region32: #{garan_attention_forward.3} parent=5 // pred_fallthru
      _
    %p256 = scmp.le.s32.totalorder 1, %s13
    %p257 = scmp.lt.s32.totalorder %s13, 3
    %p258 = pnand %p256, %p257
    %p259 = pneg %p258
    // Predicated region
    $region45: #{garan_attention_forward.3} parent=5 // pred_check
      _
    $region46: #{garan_attention_forward.3} parent=5 // pred_check_branch
      %261 = sbr.rel (%p258) target = $region48
    $region47: #{garan_attention_forward.3} parent=5 // pred_region
      %s262 = ssub.s32 %s13, 1
      %p263 = scmp.lt.s32.totalorder %s18, 1
      %s264 = scalar_select %p263, %s18, 1
      %s265 = scalar_lea.vmem %s0, %s264
      %p266 = pneg %p39
      %p267 = pneg %p36
      %s268 = smul.u32 8, %s18
      %p269 = scmp.lt.s32.totalorder %s268, 15
      %s270 = scalar_select %p269, %s268, 15
      %s271 = smul.addr %s270, 4
      %s272 = scalar_lea.vmem %s1, %s271
      %p273 = pneg %p65
      %p274 = pneg %p62
      %s275 = smul.u32 8, %s18
      %p276 = scmp.lt.s32.totalorder %s275, 15
      %s277 = scalar_select %p276, %s275, 15
      %s278 = smul.addr %s277, 8
      %s279 = scalar_lea.vmem %s2, %s278
      %p280 = pneg %p91
      %p281 = pneg %p88
      %p282 = pneg %p112
      %p283 = pneg %p109
      %p284 = pneg %p133
      %p285 = pneg %p130
      %p286 = pneg %p154
      %p287 = pneg %p151
      %p288 = pneg %p175
      %p289 = pneg %p172
      %p290 = pneg %p201
      %p291 = pneg %p198
      %s292 = smul.u32 8, %s18
      %p293 = scmp.lt.s32.totalorder %s292, 15
      %s294 = scalar_select %p293, %s292, 15
      %s295 = smul.addr %s294, 8
      %s296 = scalar_lea.vmem %s7, %s295
      %p297 = scmp.lt.s32.totalorder %s18, 1
      %s298 = scalar_select %p297, %s18, 1
      %s299 = scalar_lea.vmem %s0, %s298
      %s300 = smul.u32 8, %s18
      %p301 = scmp.lt.s32.totalorder %s300, 15
      %s302 = scalar_select %p301, %s300, 15
      %s303 = smul.addr %s302, 4
      %s304 = scalar_lea.vmem %s1, %s303
      %s305 = smul.u32 8, %s18
      %s306 = smul.u32 8, %s18
      %p307 = scmp.lt.s32.totalorder %s306, 15
      %s308 = scalar_select %p307, %s306, 15
      %s309 = smul.addr %s308, 8
      %s310 = scalar_lea.vmem %s2, %s309
      %s311 = smul.u32 8, %s18
      %s312 = smul.u32 8, %s18
      %p313 = scmp.lt.s32.totalorder %s312, 15
      %s314 = scalar_select %p313, %s312, 15
      %s315 = smul.addr %s314, 8
      %s316 = scalar_lea.vmem %s7, %s315
      %s317 = smul.u32 8, %s18
      %v319 = vld [vmem:[%s304] sm:$0xf]
      %v320 = vld [vmem:[%s304 + $0x4] sm:$0xf]
      %v321 = vld [vmem:[%s304 + $0x8] sm:$0xf]
      %v322 = vld [vmem:[%s304 + $0xc] sm:$0xf]
      %v323 = vld [vmem:[%s304 + $0x10] sm:$0xf]
      %v324 = vld [vmem:[%s304 + $0x14] sm:$0xf]
      %v325 = vld [vmem:[%s304 + $0x18] sm:$0xf]
      %v326 = vld [vmem:[%s304 + $0x1c] sm:$0xf]
      %v327 = vunpack.c.l.bf16 %v319
      %v328 = vunpack.c.l.bf16 %v320
      %v329 = vunpack.c.l.bf16 %v321
      %v330 = vunpack.c.l.bf16 %v322
      %v331 = vunpack.c.l.bf16 %v323
      %v332 = vunpack.c.l.bf16 %v324
      %v333 = vunpack.c.l.bf16 %v325
      %v334 = vunpack.c.l.bf16 %v326
      %v335 = vld [vmem:[%s299] sm:$0x1]
      %v336 = vld [vmem:[%s310] sm:$0xff]
      %v337 = vld [vmem:[%s310 + $0x8] sm:$0xff]
      %v338 = vld [vmem:[%s310 + $0x10] sm:$0xff]
      %v339 = vld [vmem:[%s310 + $0x18] sm:$0xff]
      %v340 = vld [vmem:[%s310 + $0x20] sm:$0xff]
      %v341 = vld [vmem:[%s310 + $0x28] sm:$0xff]
      %v342 = vld [vmem:[%s310 + $0x30] sm:$0xff]
      %v343 = vld [vmem:[%s310 + $0x38] sm:$0xff]
      %v345 = vlaneseq
      %v346 = vshrl.u32 %v345, 7
      %v347 = vsub.s32 0, %v346
      %v348 = vrot.slane %v335, %v347
      %v350 = vmul.f32 %v327, %v348
      %v351 = vmul.f32 %v328, %v348
      %v352 = vmul.f32 %v329, %v348
      %v353 = vmul.f32 %v330, %v348
      %v354 = vmul.f32 %v331, %v348
      %v355 = vmul.f32 %v332, %v348
      %v356 = vmul.f32 %v333, %v348
      %v357 = vmul.f32 %v334, %v348
      %vm358 = vcmask 130048
      %v359 = vsel %vm358, %v350, 0.0
      %360 = vadd.xlane.f32.xlu0 %v359
      %v361 = vpop.xlane.xlu0 %360
      %v362 = vsel %vm358, %v351, 0.0
      %363 = vadd.xlane.f32.xlu0 %v362
      %v364 = vpop.xlane.xlu0 %363
      %v365 = vsel %vm358, %v352, 0.0
      %366 = vadd.xlane.f32.xlu0 %v365
      %v367 = vpop.xlane.xlu0 %366
      %v368 = vsel %vm358, %v353, 0.0
      %369 = vadd.xlane.f32.xlu0 %v368
      %v370 = vpop.xlane.xlu0 %369
      %v371 = vsel %vm358, %v354, 0.0
      %372 = vadd.xlane.f32.xlu0 %v371
      %v373 = vpop.xlane.xlu0 %372
      %v374 = vsel %vm358, %v355, 0.0
      %375 = vadd.xlane.f32.xlu0 %v374
      %v376 = vpop.xlane.xlu0 %375
      %v377 = vsel %vm358, %v356, 0.0
      %378 = vadd.xlane.f32.xlu0 %v377
      %v379 = vpop.xlane.xlu0 %378
      %v380 = vsel %vm358, %v357, 0.0
      %381 = vadd.xlane.f32.xlu0 %v380
      %v382 = vpop.xlane.xlu0 %381
      %v383 = vmax.f32 %v361, %v373
      %v384 = vmax.f32 %v364, %v376
      %v385 = vmax.f32 %v367, %v379
      %v386 = vmax.f32 %v370, %v382
      %v387 = vmax.f32 %v383, %v384
      %v388 = vmax.f32 %v385, %v386
      %v389 = vmax.f32 %v387, %v388
      %v390 = vrot.slane %v389, 4
      %v391 = vmax.f32 %v389, %v390
      %v392 = vrot.slane %v391, 2
      %v393 = vmax.f32 %v391, %v392
      %v394 = vrot.slane %v393, 1
      %v395 = vmax.f32 %v393, %v394
      %v396 = vsub.f32 %v361, %v395
      %v397 = vsub.f32 %v364, %v395
      %v398 = vsub.f32 %v367, %v395
      %v399 = vsub.f32 %v370, %v395
      %v400 = vsub.f32 %v373, %v395
      %v401 = vsub.f32 %v376, %v395
      %v402 = vsub.f32 %v379, %v395
      %v403 = vsub.f32 %v382, %v395
      %v404 = vmul.f32 %v396, 1.442695
      %v405 = vpow.pop %v404
      %v406 = vmul.f32 %v397, 1.442695
      %v407 = vpow.pop %v406
      %v408 = vmul.f32 %v398, 1.442695
      %v409 = vpow.pop %v408
      %v410 = vmul.f32 %v399, 1.442695
      %v411 = vpow.pop %v410
      %v412 = vmul.f32 %v400, 1.442695
      %v413 = vpow.pop %v412
      %v414 = vmul.f32 %v401, 1.442695
      %v415 = vpow.pop %v414
      %v416 = vmul.f32 %v402, 1.442695
      %v417 = vpow.pop %v416
      %v418 = vmul.f32 %v403, 1.442695
      %v419 = vpow.pop %v418
      %v420 = vadd.f32 %v405, %v407
      %v421 = vadd.f32 %v420, %v409
      %v422 = vadd.f32 %v421, %v411
      %v423 = vadd.f32 %v422, %v413
      %v424 = vadd.f32 %v423, %v415
      %v425 = vadd.f32 %v424, %v417
      %v426 = vadd.f32 %v425, %v419
      %v427 = vrot.slane %v426, 4
      %v428 = vadd.f32 %v426, %v427
      %v429 = vrot.slane %v428, 2
      %v430 = vadd.f32 %v428, %v429
      %v431 = vrot.slane %v430, 1
      %v432 = vadd.f32 %v430, %v431
      %v433 = vrcp.pop %v432
      %v434 = vmul.f32 %v405, %v433
      %v435 = vmul.f32 %v407, %v433
      %v436 = vmul.f32 %v409, %v433
      %v437 = vmul.f32 %v411, %v433
      %v438 = vmul.f32 %v413, %v433
      %v439 = vmul.f32 %v415, %v433
      %v440 = vmul.f32 %v417, %v433
      %v441 = vmul.f32 %v419, %v433
      %v442 = vmul.f32 %v434, %v327
      %v443 = vmul.f32 %v435, %v328
      %v444 = vmul.f32 %v436, %v329
      %v445 = vmul.f32 %v437, %v330
      %v446 = vmul.f32 %v438, %v331
      %v447 = vmul.f32 %v439, %v332
      %v448 = vmul.f32 %v440, %v333
      %v449 = vmul.f32 %v441, %v334
      %vm450 = vcmask 654848
      %v451 = vsel %vm450, %v442, 0.0
      %v452 = vsel %vm450, %v443, 0.0
      %v453 = vadd.f32 %v451, %v452
      %v454 = vsel %vm450, %v444, 0.0
      %v455 = vadd.f32 %v453, %v454
      %v456 = vsel %vm450, %v445, 0.0
      %v457 = vadd.f32 %v455, %v456
      %v458 = vsel %vm450, %v446, 0.0
      %v459 = vadd.f32 %v457, %v458
      %v460 = vsel %vm450, %v447, 0.0
      %v461 = vadd.f32 %v459, %v460
      %v462 = vsel %vm450, %v448, 0.0
      %v463 = vadd.f32 %v461, %v462
      %v464 = vsel %vm450, %v449, 0.0
      %v465 = vadd.f32 %v463, %v464
      %v466 = vrot.slane %v465, 4
      %v467 = vadd.f32 %v465, %v466
      %v468 = vrot.slane %v467, 2
      %v469 = vadd.f32 %v467, %v468
      %v470 = vrot.slane %v469, 1
      %v471 = vadd.f32 %v469, %v470
      %472 = vrot.lane.b32.xlu0 %v348, 32
      %v473 = vpop.permute.xlu0 %472
      %v475 = vmul.f32 %v327, %v473
      %v476 = vmul.f32 %v328, %v473
      %v477 = vmul.f32 %v329, %v473
      %v478 = vmul.f32 %v330, %v473
      %v479 = vmul.f32 %v331, %v473
      %v480 = vmul.f32 %v332, %v473
      %v481 = vmul.f32 %v333, %v473
      %v482 = vmul.f32 %v334, %v473
      %491 = vrot.lane.b32.xlu0 %v475, 96
      %v492 = vpop.permute.xlu0 %491
      %493 = vrot.lane.b32.xlu0 %v476, 96
      %v494 = vpop.permute.xlu0 %493
      %495 = vrot.lane.b32.xlu0 %v477, 96
      %v496 = vpop.permute.xlu0 %495
      %497 = vrot.lane.b32.xlu0 %v478, 96
      %v498 = vpop.permute.xlu0 %497
      %499 = vrot.lane.b32.xlu0 %v479, 96
      %v500 = vpop.permute.xlu0 %499
      %501 = vrot.lane.b32.xlu0 %v480, 96
      %v502 = vpop.permute.xlu0 %501
      %503 = vrot.lane.b32.xlu0 %v481, 96
      %v504 = vpop.permute.xlu0 %503
      %505 = vrot.lane.b32.xlu0 %v482, 96
      %v506 = vpop.permute.xlu0 %505
      %v515 = vsel %vm358, %v492, 0.0
      %516 = vadd.xlane.f32.xlu0 %v515
      %v517 = vpop.xlane.xlu0 %516
      %v518 = vsel %vm358, %v494, 0.0
      %519 = vadd.xlane.f32.xlu0 %v518
      %v520 = vpop.xlane.xlu0 %519
      %v521 = vsel %vm358, %v496, 0.0
      %522 = vadd.xlane.f32.xlu0 %v521
      %v523 = vpop.xlane.xlu0 %522
      %v524 = vsel %vm358, %v498, 0.0
      %525 = vadd.xlane.f32.xlu0 %v524
      %v526 = vpop.xlane.xlu0 %525
      %v527 = vsel %vm358, %v500, 0.0
      %528 = vadd.xlane.f32.xlu0 %v527
      %v529 = vpop.xlane.xlu0 %528
      %v530 = vsel %vm358, %v502, 0.0
      %531 = vadd.xlane.f32.xlu0 %v530
      %v532 = vpop.xlane.xlu0 %531
      %v533 = vsel %vm358, %v504, 0.0
      %534 = vadd.xlane.f32.xlu0 %v533
      %v535 = vpop.xlane.xlu0 %534
      %v536 = vsel %vm358, %v506, 0.0
      %537 = vadd.xlane.f32.xlu0 %v536
      %v538 = vpop.xlane.xlu0 %537
      %v539 = vxor.u32 %v517, 2147483648
      %v540 = vxor.u32 %v520, 2147483648
      %v541 = vxor.u32 %v523, 2147483648
      %v542 = vxor.u32 %v526, 2147483648
      %v543 = vxor.u32 %v529, 2147483648
      %v544 = vxor.u32 %v532, 2147483648
      %v545 = vxor.u32 %v535, 2147483648
      %v546 = vxor.u32 %v538, 2147483648
      %v547 = vmul.f32 %v539, 1.442695
      %v548 = vpow.pop %v547
      %v549 = vmul.f32 %v540, 1.442695
      %v550 = vpow.pop %v549
      %v551 = vmul.f32 %v541, 1.442695
      %v552 = vpow.pop %v551
      %v553 = vmul.f32 %v542, 1.442695
      %v554 = vpow.pop %v553
      %v555 = vmul.f32 %v543, 1.442695
      %v556 = vpow.pop %v555
      %v557 = vmul.f32 %v544, 1.442695
      %v558 = vpow.pop %v557
      %v559 = vmul.f32 %v545, 1.442695
      %v560 = vpow.pop %v559
      %v561 = vmul.f32 %v546, 1.442695
      %v562 = vpow.pop %v561
      %v563 = vadd.f32 %v548, 1.0
      %v564 = vadd.f32 %v550, 1.0
      %v565 = vadd.f32 %v552, 1.0
      %v566 = vadd.f32 %v554, 1.0
      %v567 = vadd.f32 %v556, 1.0
      %v568 = vadd.f32 %v558, 1.0
      %v569 = vadd.f32 %v560, 1.0
      %v570 = vadd.f32 %v562, 1.0
      %v571 = vrcp.pop %v563
      %v572 = vmul.f32 1.0, %v571
      %v573 = vrcp.pop %v564
      %v574 = vmul.f32 1.0, %v573
      %v575 = vrcp.pop %v565
      %v576 = vmul.f32 1.0, %v575
      %v577 = vrcp.pop %v566
      %v578 = vmul.f32 1.0, %v577
      %v579 = vrcp.pop %v567
      %v580 = vmul.f32 1.0, %v579
      %v581 = vrcp.pop %v568
      %v582 = vmul.f32 1.0, %v581
      %v583 = vrcp.pop %v569
      %v584 = vmul.f32 1.0, %v583
      %v585 = vrcp.pop %v570
      %v586 = vmul.f32 1.0, %v585
      %v587 = vmul.f32 %v572, %v471
      %v588 = vmul.f32 %v574, %v471
      %v589 = vmul.f32 %v576, %v471
      %v590 = vmul.f32 %v578, %v471
      %v591 = vmul.f32 %v580, %v471
      %v592 = vmul.f32 %v582, %v471
      %v593 = vmul.f32 %v584, %v471
      %v594 = vmul.f32 %v586, %v471
      %603 = vrot.lane.b32.xlu0 %v350, 112
      %v604 = vpop.permute.xlu0 %603
      %605 = vrot.lane.b32.xlu0 %v351, 112
      %v606 = vpop.permute.xlu0 %605
      %607 = vrot.lane.b32.xlu0 %v352, 112
      %v608 = vpop.permute.xlu0 %607
      %609 = vrot.lane.b32.xlu0 %v353, 112
      %v610 = vpop.permute.xlu0 %609
      %611 = vrot.lane.b32.xlu0 %v354, 112
      %v612 = vpop.permute.xlu0 %611
      %613 = vrot.lane.b32.xlu0 %v355, 112
      %v614 = vpop.permute.xlu0 %613
      %615 = vrot.lane.b32.xlu0 %v356, 112
      %v616 = vpop.permute.xlu0 %615
      %617 = vrot.lane.b32.xlu0 %v357, 112
      %v618 = vpop.permute.xlu0 %617
      %v627 = vsel %vm358, %v604, 0.0
      %628 = vadd.xlane.f32.xlu0 %v627
      %v629 = vpop.xlane.xlu0 %628
      %v630 = vsel %vm358, %v606, 0.0
      %631 = vadd.xlane.f32.xlu0 %v630
      %v632 = vpop.xlane.xlu0 %631
      %v633 = vsel %vm358, %v608, 0.0
      %634 = vadd.xlane.f32.xlu0 %v633
      %v635 = vpop.xlane.xlu0 %634
      %v636 = vsel %vm358, %v610, 0.0
      %637 = vadd.xlane.f32.xlu0 %v636
      %v638 = vpop.xlane.xlu0 %637
      %v639 = vsel %vm358, %v612, 0.0
      %640 = vadd.xlane.f32.xlu0 %v639
      %v641 = vpop.xlane.xlu0 %640
      %v642 = vsel %vm358, %v614, 0.0
      %643 = vadd.xlane.f32.xlu0 %v642
      %v644 = vpop.xlane.xlu0 %643
      %v645 = vsel %vm358, %v616, 0.0
      %646 = vadd.xlane.f32.xlu0 %v645
      %v647 = vpop.xlane.xlu0 %646
      %v648 = vsel %vm358, %v618, 0.0
      %649 = vadd.xlane.f32.xlu0 %v648
      %v650 = vpop.xlane.xlu0 %649
      %v651 = vmax.f32 %v629, %v641
      %v652 = vmax.f32 %v632, %v644
      %v653 = vmax.f32 %v635, %v647
      %v654 = vmax.f32 %v638, %v650
      %v655 = vmax.f32 %v651, %v652
      %v656 = vmax.f32 %v653, %v654
      %v657 = vmax.f32 %v655, %v656
      %v658 = vrot.slane %v657, 4
      %v659 = vmax.f32 %v657, %v658
      %v660 = vrot.slane %v659, 2
      %v661 = vmax.f32 %v659, %v660
      %v662 = vrot.slane %v661, 1
      %v663 = vmax.f32 %v661, %v662
      %v664 = vsub.f32 %v629, %v663
      %v665 = vsub.f32 %v632, %v663
      %v666 = vsub.f32 %v635, %v663
      %v667 = vsub.f32 %v638, %v663
      %v668 = vsub.f32 %v641, %v663
      %v669 = vsub.f32 %v644, %v663
      %v670 = vsub.f32 %v647, %v663
      %v671 = vsub.f32 %v650, %v663
      %v672 = vmul.f32 %v664, 1.442695
      %v673 = vpow.pop %v672
      %v674 = vmul.f32 %v665, 1.442695
      %v675 = vpow.pop %v674
      %v676 = vmul.f32 %v666, 1.442695
      %v677 = vpow.pop %v676
      %v678 = vmul.f32 %v667, 1.442695
      %v679 = vpow.pop %v678
      %v680 = vmul.f32 %v668, 1.442695
      %v681 = vpow.pop %v680
      %v682 = vmul.f32 %v669, 1.442695
      %v683 = vpow.pop %v682
      %v684 = vmul.f32 %v670, 1.442695
      %v685 = vpow.pop %v684
      %v686 = vmul.f32 %v671, 1.442695
      %v687 = vpow.pop %v686
      %v688 = vadd.f32 %v673, %v675
      %v689 = vadd.f32 %v688, %v677
      %v690 = vadd.f32 %v689, %v679
      %v691 = vadd.f32 %v690, %v681
      %v692 = vadd.f32 %v691, %v683
      %v693 = vadd.f32 %v692, %v685
      %v694 = vadd.f32 %v693, %v687
      %v695 = vrot.slane %v694, 4
      %v696 = vadd.f32 %v694, %v695
      %v697 = vrot.slane %v696, 2
      %v698 = vadd.f32 %v696, %v697
      %v699 = vrot.slane %v698, 1
      %v700 = vadd.f32 %v698, %v699
      %v701 = vrcp.pop %v700
      %v702 = vmul.f32 %v673, %v701
      %v703 = vmul.f32 %v675, %v701
      %v704 = vmul.f32 %v677, %v701
      %v705 = vmul.f32 %v679, %v701
      %v706 = vmul.f32 %v681, %v701
      %v707 = vmul.f32 %v683, %v701
      %v708 = vmul.f32 %v685, %v701
      %v709 = vmul.f32 %v687, %v701
      %v710 = vmul.f32 %v702, %v327
      %v711 = vmul.f32 %v703, %v328
      %v712 = vmul.f32 %v704, %v329
      %v713 = vmul.f32 %v705, %v330
      %v714 = vmul.f32 %v706, %v331
      %v715 = vmul.f32 %v707, %v332
      %v716 = vmul.f32 %v708, %v333
      %v717 = vmul.f32 %v709, %v334
      %vm718 = vcmask 786048
      %v719 = vsel %vm718, %v710, 0.0
      %v720 = vsel %vm718, %v711, 0.0
      %v721 = vadd.f32 %v719, %v720
      %v722 = vsel %vm718, %v712, 0.0
      %v723 = vadd.f32 %v721, %v722
      %v724 = vsel %vm718, %v713, 0.0
      %v725 = vadd.f32 %v723, %v724
      %v726 = vsel %vm718, %v714, 0.0
      %v727 = vadd.f32 %v725, %v726
      %v728 = vsel %vm718, %v715, 0.0
      %v729 = vadd.f32 %v727, %v728
      %v730 = vsel %vm718, %v716, 0.0
      %v731 = vadd.f32 %v729, %v730
      %v732 = vsel %vm718, %v717, 0.0
      %v733 = vadd.f32 %v731, %v732
      %v734 = vrot.slane %v733, 4
      %v735 = vadd.f32 %v733, %v734
      %v736 = vrot.slane %v735, 2
      %v737 = vadd.f32 %v735, %v736
      %v738 = vrot.slane %v737, 1
      %v739 = vadd.f32 %v737, %v738
      %740 = vrot.lane.b32.xlu0 %v475, 80
      %v741 = vpop.permute.xlu0 %740
      %742 = vrot.lane.b32.xlu0 %v476, 80
      %v743 = vpop.permute.xlu0 %742
      %744 = vrot.lane.b32.xlu0 %v477, 80
      %v745 = vpop.permute.xlu0 %744
      %746 = vrot.lane.b32.xlu0 %v478, 80
      %v747 = vpop.permute.xlu0 %746
      %748 = vrot.lane.b32.xlu0 %v479, 80
      %v749 = vpop.permute.xlu0 %748
      %750 = vrot.lane.b32.xlu0 %v480, 80
      %v751 = vpop.permute.xlu0 %750
      %752 = vrot.lane.b32.xlu0 %v481, 80
      %v753 = vpop.permute.xlu0 %752
      %754 = vrot.lane.b32.xlu0 %v482, 80
      %v755 = vpop.permute.xlu0 %754
      %v764 = vsel %vm358, %v741, 0.0
      %765 = vadd.xlane.f32.xlu0 %v764
      %v766 = vpop.xlane.xlu0 %765
      %v767 = vsel %vm358, %v743, 0.0
      %768 = vadd.xlane.f32.xlu0 %v767
      %v769 = vpop.xlane.xlu0 %768
      %v770 = vsel %vm358, %v745, 0.0
      %771 = vadd.xlane.f32.xlu0 %v770
      %v772 = vpop.xlane.xlu0 %771
      %v773 = vsel %vm358, %v747, 0.0
      %774 = vadd.xlane.f32.xlu0 %v773
      %v775 = vpop.xlane.xlu0 %774
      %v776 = vsel %vm358, %v749, 0.0
      %777 = vadd.xlane.f32.xlu0 %v776
      %v778 = vpop.xlane.xlu0 %777
      %v779 = vsel %vm358, %v751, 0.0
      %780 = vadd.xlane.f32.xlu0 %v779
      %v781 = vpop.xlane.xlu0 %780
      %v782 = vsel %vm358, %v753, 0.0
      %783 = vadd.xlane.f32.xlu0 %v782
      %v784 = vpop.xlane.xlu0 %783
      %v785 = vsel %vm358, %v755, 0.0
      %786 = vadd.xlane.f32.xlu0 %v785
      %v787 = vpop.xlane.xlu0 %786
      %v788 = vxor.u32 %v766, 2147483648
      %v789 = vxor.u32 %v769, 2147483648
      %v790 = vxor.u32 %v772, 2147483648
      %v791 = vxor.u32 %v775, 2147483648
      %v792 = vxor.u32 %v778, 2147483648
      %v793 = vxor.u32 %v781, 2147483648
      %v794 = vxor.u32 %v784, 2147483648
      %v795 = vxor.u32 %v787, 2147483648
      %v796 = vmul.f32 %v788, 1.442695
      %v797 = vpow.pop %v796
      %v798 = vmul.f32 %v789, 1.442695
      %v799 = vpow.pop %v798
      %v800 = vmul.f32 %v790, 1.442695
      %v801 = vpow.pop %v800
      %v802 = vmul.f32 %v791, 1.442695
      %v803 = vpow.pop %v802
      %v804 = vmul.f32 %v792, 1.442695
      %v805 = vpow.pop %v804
      %v806 = vmul.f32 %v793, 1.442695
      %v807 = vpow.pop %v806
      %v808 = vmul.f32 %v794, 1.442695
      %v809 = vpow.pop %v808
      %v810 = vmul.f32 %v795, 1.442695
      %v811 = vpow.pop %v810
      %v812 = vadd.f32 %v797, 1.0
      %v813 = vadd.f32 %v799, 1.0
      %v814 = vadd.f32 %v801, 1.0
      %v815 = vadd.f32 %v803, 1.0
      %v816 = vadd.f32 %v805, 1.0
      %v817 = vadd.f32 %v807, 1.0
      %v818 = vadd.f32 %v809, 1.0
      %v819 = vadd.f32 %v811, 1.0
      %v820 = vrcp.pop %v812
      %v821 = vmul.f32 1.0, %v820
      %v822 = vrcp.pop %v813
      %v823 = vmul.f32 1.0, %v822
      %v824 = vrcp.pop %v814
      %v825 = vmul.f32 1.0, %v824
      %v826 = vrcp.pop %v815
      %v827 = vmul.f32 1.0, %v826
      %v828 = vrcp.pop %v816
      %v829 = vmul.f32 1.0, %v828
      %v830 = vrcp.pop %v817
      %v831 = vmul.f32 1.0, %v830
      %v832 = vrcp.pop %v818
      %v833 = vmul.f32 1.0, %v832
      %v834 = vrcp.pop %v819
      %v835 = vmul.f32 1.0, %v834
      %v836 = vmul.f32 %v821, %v739
      %v837 = vmul.f32 %v823, %v739
      %v838 = vmul.f32 %v825, %v739
      %v839 = vmul.f32 %v827, %v739
      %v840 = vmul.f32 %v829, %v739
      %v841 = vmul.f32 %v831, %v739
      %v842 = vmul.f32 %v833, %v739
      %v843 = vmul.f32 %v835, %v739
      %852 = vrot.lane.b32.xlu0 %v587, 64
      %v853 = vpop.permute.xlu0 %852
      %854 = vrot.lane.b32.xlu0 %v588, 64
      %v855 = vpop.permute.xlu0 %854
      %856 = vrot.lane.b32.xlu0 %v589, 64
      %v857 = vpop.permute.xlu0 %856
      %858 = vrot.lane.b32.xlu0 %v590, 64
      %v859 = vpop.permute.xlu0 %858
      %860 = vrot.lane.b32.xlu0 %v591, 64
      %v861 = vpop.permute.xlu0 %860
      %862 = vrot.lane.b32.xlu0 %v592, 64
      %v863 = vpop.permute.xlu0 %862
      %864 = vrot.lane.b32.xlu0 %v593, 64
      %v865 = vpop.permute.xlu0 %864
      %866 = vrot.lane.b32.xlu0 %v594, 64
      %v867 = vpop.permute.xlu0 %866
      %884 = vrot.lane.b32.xlu0 %v836, 64
      %v885 = vpop.permute.xlu0 %884
      %886 = vrot.lane.b32.xlu0 %v837, 64
      %v887 = vpop.permute.xlu0 %886
      %888 = vrot.lane.b32.xlu0 %v838, 64
      %v889 = vpop.permute.xlu0 %888
      %890 = vrot.lane.b32.xlu0 %v839, 64
      %v891 = vpop.permute.xlu0 %890
      %892 = vrot.lane.b32.xlu0 %v840, 64
      %v893 = vpop.permute.xlu0 %892
      %894 = vrot.lane.b32.xlu0 %v841, 64
      %v895 = vpop.permute.xlu0 %894
      %896 = vrot.lane.b32.xlu0 %v842, 64
      %v897 = vpop.permute.xlu0 %896
      %898 = vrot.lane.b32.xlu0 %v843, 64
      %v899 = vpop.permute.xlu0 %898
      %v908 = vsel %vm358, %v853, %v885
      %v909 = vsel %vm358, %v855, %v887
      %v910 = vsel %vm358, %v857, %v889
      %v911 = vsel %vm358, %v859, %v891
      %v912 = vsel %vm358, %v861, %v893
      %v913 = vsel %vm358, %v863, %v895
      %v914 = vsel %vm358, %v865, %v897
      %v915 = vsel %vm358, %v867, %v899
      %v916 = vpack.c.bf16 %v909, %v908
      %v917 = vpack.c.bf16 %v911, %v910
      %v918 = vpack.c.bf16 %v913, %v912
      %v919 = vpack.c.bf16 %v915, %v914
      %v920 = vld [vmem:[%s3] sm:$0xf]
      %v921 = vld [vmem:[%s3 + $0x4] sm:$0xf]
      %v922 = vld [vmem:[%s3 + $0x8] sm:$0xf]
      %v923 = vld [vmem:[%s3 + $0xc] sm:$0xf]
      %v924 = vld [vmem:[%s4] sm:$0x1]
      %v926 = vlaneseq
      %v927 = vshrl.u32 %v926, 7
      %v928 = vsub.s32 0, %v927
      %v929 = vrot.slane %v924, %v928
      %v935 = vunpack.c.l.b16 %v920
      %v936 = vunpack.c.l.b16 %v921
      %v937 = vunpack.c.l.b16 %v922
      %v938 = vunpack.c.l.b16 %v923
      %v939 = vpack.c.b16 %v936, %v935
      %v940 = vpack.c.b16 %v938, %v937
      %vm943 = vcmask 261120
      %v945 = vsel %vm943, %v916, 0
      %v948 = vsel %vm943, %v917, 0
      %v951 = vsel %vm943, %v918, 0
      %v954 = vsel %vm943, %v919, 0
      %956 = vmatprep.subr.bf16.mxu0 0
      %957 = vmatpush1.bf16.msra.mxu0 %v939
      %958 = vmatprep.subr.bf16.mxu0 0
      %959 = vmatpush1.bf16.msra.mxu0 %v940
      %960 = vmatprep.subr.bf16.mxu0 0
      %961 = vmatpush1.bf16.msra.mxu0 0
      %962 = vmatprep.subr.bf16.mxu0 0
      %963 = vmatpush1.bf16.msra.mxu0 0
      %964 = vmatprep.subr.bf16.mxu0 0
      %965 = vmatpush1.bf16.msra.mxu0 0
      %966 = vmatprep.subr.bf16.mxu0 0
      %967 = vmatpush1.bf16.msra.mxu0 0
      %968 = vmatprep.subr.bf16.mxu0 0
      %969 = vmatpush1.bf16.msra.mxu0 0
      %970 = vmatprep.subr.bf16.mxu0 0
      %971 = vmatpush1.bf16.msra.mxu0 0
      %972 = vmatprep.subr.bf16.mxu0 0
      %973 = vmatpush1.bf16.msra.mxu0 0
      %974 = vmatprep.subr.bf16.mxu0 0
      %975 = vmatpush1.bf16.msra.mxu0 0
      %976 = vmatprep.subr.bf16.mxu0 0
      %977 = vmatpush1.bf16.msra.mxu0 0
      %978 = vmatprep.subr.bf16.mxu0 0
      %979 = vmatpush1.bf16.msra.mxu0 0
      %980 = vmatprep.subr.bf16.mxu0 0
      %981 = vmatpush1.bf16.msra.mxu0 0
      %982 = vmatprep.subr.bf16.mxu0 0
      %983 = vmatpush1.bf16.msra.mxu0 0
      %984 = vmatprep.subr.bf16.mxu0 0
      %985 = vmatpush1.bf16.msra.mxu0 0
      %986 = vmatprep.subr.bf16.mxu0 0
      %987 = vmatpush1.bf16.msra.mxu0 0
      %988 = vmatprep.mubr.bf16.mxu0 0
      %989 = vmatmul.mubr.bf16.gmra.mrb[0].mxu0 %v945
      %v990 = vpop.f32.mrb[0].mxu0
      %v991 = vadd.f32 %v929, %v990
      %v992 = vpop.f32.mrb[0].mxu0
      %v993 = vpop.f32.mrb[0].mxu0
      %v994 = vadd.f32 %v929, %v993
      %v995 = vpop.f32.mrb[0].mxu0
      %996 = vmatprep.mubr.bf16.mxu0 0
      %997 = vmatmul.mubr.bf16.gmra.mrb[0].mxu0 %v948
      %v998 = vpop.f32.mrb[0].mxu0
      %v999 = vadd.f32 %v929, %v998
      %v1000 = vpop.f32.mrb[0].mxu0
      %v1001 = vpop.f32.mrb[0].mxu0
      %v1002 = vadd.f32 %v929, %v1001
      %v1003 = vpop.f32.mrb[0].mxu0
      %1004 = vmatprep.mubr.bf16.mxu0 0
      %1005 = vmatmul.mubr.bf16.gmra.mrb[0].mxu0 %v951
      %v1006 = vpop.f32.mrb[0].mxu0
      %v1007 = vadd.f32 %v929, %v1006
      %v1008 = vpop.f32.mrb[0].mxu0
      %v1009 = vpop.f32.mrb[0].mxu0
      %v1010 = vadd.f32 %v929, %v1009
      %v1011 = vpop.f32.mrb[0].mxu0
      %1012 = vmatprep.mubr.bf16.mxu0 0
      %1013 = vmatmul.mubr.bf16.gmra.mrb[0].mxu0 %v954
      %v1014 = vpop.f32.mrb[0].mxu0
      %v1015 = vadd.f32 %v929, %v1014
      %v1016 = vpop.f32.mrb[0].mxu0
      %v1017 = vpop.f32.mrb[0].mxu0
      %v1018 = vadd.f32 %v929, %v1017
      %v1019 = vpop.f32.mrb[0].mxu0
      %1020 = vdwg.mxu0
      %v1021 = vld [vmem:[%s5] sm:$0x1]
      %v1023 = vlaneseq
      %v1024 = vshrl.u32 %v1023, 7
      %v1025 = vsub.s32 0, %v1024
      %v1026 = vrot.slane %v1021, %v1025
      %v1028 = vmul.f32 %v991, %v1026
      %v1029 = vmul.f32 %v994, %v1026
      %v1030 = vmul.f32 %v999, %v1026
      %v1031 = vmul.f32 %v1002, %v1026
      %v1032 = vmul.f32 %v1007, %v1026
      %v1033 = vmul.f32 %v1010, %v1026
      %v1034 = vmul.f32 %v1015, %v1026
      %v1035 = vmul.f32 %v1018, %v1026
      %v1036 = vld [vmem:[%s6] sm:$0x1]
      %v1038 = vlaneseq
      %v1039 = vshrl.u32 %v1038, 7
      %v1040 = vsub.s32 0, %v1039
      %v1041 = vrot.slane %v1036, %v1040
      %v1043 = vadd.f32 %v1028, %v1041
      %v1044 = vadd.f32 %v1029, %v1041
      %v1045 = vadd.f32 %v1030, %v1041
      %v1046 = vadd.f32 %v1031, %v1041
      %v1047 = vadd.f32 %v1032, %v1041
      %v1048 = vadd.f32 %v1033, %v1041
      %v1049 = vadd.f32 %v1034, %v1041
      %v1050 = vadd.f32 %v1035, %v1041
      %v1051 = vadd.f32 %v1043, %v336
      %v1052 = vadd.f32 %v1044, %v337
      %v1053 = vadd.f32 %v1045, %v338
      %v1054 = vadd.f32 %v1046, %v339
      %v1055 = vadd.f32 %v1047, %v340
      %v1056 = vadd.f32 %v1048, %v341
      %v1057 = vadd.f32 %v1049, %v342
      %v1058 = vadd.f32 %v1050, %v343
      %vm1059 = vcmp.ge.f32.partialorder %v1051, 0.0
      %vm1060 = vcmp.ge.f32.partialorder %v1052, 0.0
      %vm1061 = vcmp.ge.f32.partialorder %v1053, 0.0
      %vm1062 = vcmp.ge.f32.partialorder %v1054, 0.0
      %vm1063 = vcmp.ge.f32.partialorder %v1055, 0.0
      %vm1064 = vcmp.ge.f32.partialorder %v1056, 0.0
      %vm1065 = vcmp.ge.f32.partialorder %v1057, 0.0
      %vm1066 = vcmp.ge.f32.partialorder %v1058, 0.0
      %v1067 = vmul.f32 %v1051, 0.1
      %v1068 = vmul.f32 %v1052, 0.1
      %v1069 = vmul.f32 %v1053, 0.1
      %v1070 = vmul.f32 %v1054, 0.1
      %v1071 = vmul.f32 %v1055, 0.1
      %v1072 = vmul.f32 %v1056, 0.1
      %v1073 = vmul.f32 %v1057, 0.1
      %v1074 = vmul.f32 %v1058, 0.1
      %v1075 = vsel %vm1059, %v1051, %v1067
      %v1076 = vsel %vm1060, %v1052, %v1068
      %v1077 = vsel %vm1061, %v1053, %v1069
      %v1078 = vsel %vm1062, %v1054, %v1070
      %v1079 = vsel %vm1063, %v1055, %v1071
      %v1080 = vsel %vm1064, %v1056, %v1072
      %v1081 = vsel %vm1065, %v1057, %v1073
      %v1082 = vsel %vm1066, %v1058, %v1074
      %v1083 = vsel %vm943, %v1075, %v991
      %v1084 = vsel %vm943, %v1076, %v994
      %v1085 = vsel %vm943, %v1077, %v999
      %v1086 = vsel %vm943, %v1078, %v1002
      %v1087 = vsel %vm943, %v1079, %v1007
      %v1088 = vsel %vm943, %v1080, %v1010
      %v1089 = vsel %vm943, %v1081, %v1015
      %v1090 = vsel %vm943, %v1082, %v1018
      %1091 = vst [vmem:[%s316] sm:$0xff] %v1083
      %1092 = vst [vmem:[%s316 + $0x8] sm:$0xff] %v1084
      %1093 = vst [vmem:[%s316 + $0x10] sm:$0xff] %v1085
      %1094 = vst [vmem:[%s316 + $0x18] sm:$0xff] %v1086
      %1095 = vst [vmem:[%s316 + $0x20] sm:$0xff] %v1087
      %1096 = vst [vmem:[%s316 + $0x28] sm:$0xff] %v1088
      %1097 = vst [vmem:[%s316 + $0x30] sm:$0xff] %v1089
      %1098 = vst [vmem:[%s316 + $0x38] sm:$0xff] %v1090
      %s1099 = smul.u32 8, %s18
      %p1100 = scmp.lt.s32.totalorder %s1099, 15
      %s1101 = scalar_select %p1100, %s1099, 15
      %s1102 = smul.addr %s1101, 8
      %s1103 = scalar_lea.vmem %s7, %s1102
      // Predicated region
      $region49: #{garan_attention_forward.3} parent=47 // pred_check
        %p1104 = pneg %p198
      $region50: #{garan_attention_forward.3} parent=47 // pred_check_branch
        %1106 = sbr.rel (%p1104) target = $region52
      $region51: #{garan_attention_forward.3} parent=47 // pred_region
        %s1107 = smul.u32 8, %s18
      $region52: #{garan_attention_forward.3} parent=47 // pred_fallthru
        _
    $region48: #{garan_attention_forward.3} parent=5 // pred_fallthru
      _
    %p1108 = scmp.le.s32.totalorder 2, %s13
    // Predicated region
    $region53: #{garan_attention_forward.3} parent=5 // pred_check
      %p1109 = pneg %p1108
    $region54: #{garan_attention_forward.3} parent=5 // pred_check_branch
      %1111 = sbr.rel (%p1109) target = $region56
    $region55: #{garan_attention_forward.3} parent=5 // pred_region
      %s1112 = ssub.s32 %s13, 2
      // Predicated region
      $region57: #{garan_attention_forward.3} parent=55 // pred_check
        %p1113 = pneg %p204
      $region58: #{garan_attention_forward.3} parent=55 // pred_check_branch
        %1115 = sbr.rel (%p1113) target = $region60
      $region59: #{garan_attention_forward.3} parent=55 // pred_region
        %s1116 = smul.u32 8, %s19
        %p1117 = scmp.lt.s32.totalorder %s1116, 15
        %s1118 = scalar_select %p1117, %s1116, 15
        %s1119 = smul.addr %s1118, 8
        %s1120 = scalar_lea.vmem %s7, %s1119
      $region60: #{garan_attention_forward.3} parent=55 // pred_fallthru
        _
    $region56: #{garan_attention_forward.3} parent=5 // pred_fallthru
      _
  $region6: #{garan_attention_forward.3} parent=0 // loop_footer
    %s17 = sadd.s32 1, %s13
  $region7: #{garan_attention_forward.3} parent=0 // loop_footer_branch
    %12 = sbr.rel target = $region3
  $region8: #{garan_attention_forward.3} parent=0 // loop_exit
    _

</llo_original>
